<compile_context>
chip_gen: v6e
topology: v6e:2x2x1
jax: 0.10.0
libtpu: 0.0.40
codegen_flags: <defaults>
</compile_context>

<pallas_src>
import functools

import jax
import jax.numpy as jnp
from jax import lax
from jax.experimental import pallas as pl
from jax.experimental.pallas import tpu as pltpu

DILATIONS = (3, 5, 7)
MAX_PAD = max(DILATIONS)
BN_EPS = 1e-3


def _dilate_odd_kernel(x_ref, w_ref, b_ref, m_ref, o_ref, col_ref, *, H, W, C, hid, pad):
    # x_ref  : (1, C, H*W + 2*pad)  flat-spatial padded input (f32)
    # w_ref  : (3, hid, 9*C)        per-branch weights, BN scale folded (compute dtype)
    # b_ref  : (3, hid, 1)          folded conv-bias + BN bias (f32)
    # m_ref  : (27, H*W)            per-tap validity masks (f32)
    # o_ref  : (1, 3*hid, H*W)      concatenated output (f32)
    # col_ref: (3, 9*C, H*W)        im2col scratch (compute dtype)
    HW = H * W
    for di, d in enumerate(DILATIONS):
        # Build the im2col buffer for this dilation: row (t*C + c) holds input channel
        # c shifted by tap t; out-of-range / row-wrap positions are masked to 0.
        for kh in range(3):
            for kw in range(3):
                t = kh * 3 + kw
                off = pad + (kh - 1) * d * W + (kw - 1) * d          # static offset
                xs = x_ref[0, :, off:off + HW]                        # (C, HW) f32
                m = m_ref[di * 9 + t, :]                              # (HW,)  f32
                col_ref[di, t * C:(t + 1) * C, :] = (xs * m).astype(col_ref.dtype)
        # One fused MXU matmul per branch: (hid, 9*C) x (9*C, HW) -> (hid, HW), f32 acc.
        y = jnp.dot(w_ref[di], col_ref[di], preferred_element_type=jnp.float32)
        y = jnp.maximum(y + b_ref[di], 0.0)                           # bias + ReLU in f32
        o_ref[0, di * hid:(di + 1) * hid, :] = y.astype(o_ref.dtype)


def dilate_odd_block(x_nchw, params, compute_dtype=jnp.bfloat16):
    """Pallas implementation of Dilate_odd_block.forward (BatchNorm in eval mode).

    x_nchw: (N, C, H, W) float32.  Returns (N, 3*hid, H, W) float32.
    """
    N, C, H, W = x_nchw.shape
    hid = params["w"][0].shape[0]
    HW = H * W
    # Flat-spatial halo: max shift is MAX_PAD rows + MAX_PAD cols; round up to 128 lanes.
    pad = -(-(MAX_PAD * (W + 1)) // 128) * 128

    # Pad once on the flattened spatial axis (no transposes, no 2-D pad).
    xpf = jnp.pad(x_nchw.reshape(N, C, HW), ((0, 0), (0, 0), (pad, pad)))

    # Fold BN (eval) scale into conv weights; bias = (conv_b - mean)*scale + beta.
    w_list, b_list = [], []
    for i in range(len(DILATIONS)):
        scale = params["gamma"][i] / jnp.sqrt(params["var"][i] + BN_EPS)      # (hid,)
        wf = params["w"][i] * scale[:, None, None, None]                      # (hid,C,3,3)
        # (hid, C, kh, kw) -> (hid, kh, kw, C) -> (hid, 9*C); im2col row = t*C + c.
        w_list.append(jnp.transpose(wf, (0, 2, 3, 1)).reshape(hid, 9 * C))
        b_list.append(params["beta"][i] + (params["conv_b"][i] - params["mean"][i]) * scale)
    w_all = jnp.stack(w_list).astype(compute_dtype)                           # (3, hid, 9C)
    b_all = jnp.stack(b_list).astype(jnp.float32)[..., None]                  # (3, hid, 1)

    # Per-tap validity masks (zero H/W-boundary and row-wraparound contributions).
    ii = jnp.arange(H, dtype=jnp.int32)[:, None]
    jj = jnp.arange(W, dtype=jnp.int32)[None, :]
    masks = []
    for d in DILATIONS:
        for kh in range(3):
            for kw in range(3):
                src_i = ii + (kh - 1) * d
                src_j = jj + (kw - 1) * d
                ok = (src_i >= 0) & (src_i < H) & (src_j >= 0) & (src_j < W)
                masks.append(ok.astype(jnp.float32).reshape(HW))
    masks = jnp.stack(masks)                                                  # (27, HW)

    kernel = functools.partial(_dilate_odd_kernel, H=H, W=W, C=C, hid=hid, pad=pad)
    out_flat = pl.pallas_call(
        kernel,
        out_shape=jax.ShapeDtypeStruct((N, 3 * hid, HW), jnp.float32),
        grid=(N,),
        in_specs=[
            pl.BlockSpec((1, C, HW + 2 * pad), lambda n: (n, 0, 0)),
            pl.BlockSpec((len(DILATIONS), hid, 9 * C), lambda n: (0, 0, 0)),
            pl.BlockSpec((len(DILATIONS), hid, 1), lambda n: (0, 0, 0)),
            pl.BlockSpec((9 * len(DILATIONS), HW), lambda n: (0, 0)),
        ],
        out_specs=pl.BlockSpec((1, 3 * hid, HW), lambda n: (n, 0, 0)),
        scratch_shapes=[pltpu.VMEM((len(DILATIONS), 9 * C, HW), compute_dtype)],
        compiler_params=pltpu.CompilerParams(dimension_semantics=("parallel",)),
    )(xpf, w_all, b_all, masks)
    # Trailing-dim split back to (N, 3*hid, H, W) is a free reshape.
    return out_flat.reshape(N, 3 * hid, H, W)


def _reference(x_nchw, params):
    """Plain-JAX reference (lax conv) for correctness check."""
    outs = []
    for i, d in enumerate(DILATIONS):
        w, cb = params["w"][i], params["conv_b"][i]
        y = lax.conv_general_dilated(
            x_nchw, w, window_strides=(1, 1), padding=[(d, d), (d, d)],
            rhs_dilation=(d, d), dimension_numbers=("NCHW", "OIHW", "NCHW"))
        y = y + cb[None, :, None, None]
        s = params["gamma"][i] / jnp.sqrt(params["var"][i] + BN_EPS)
        y = (y - params["mean"][i][None, :, None, None]) * s[None, :, None, None] \
            + params["beta"][i][None, :, None, None]
        outs.append(jnp.maximum(y, 0.0))
    return jnp.concatenate(outs, axis=1)


def _make_params(key, num_channels, hid_channels):
    params = {"w": [], "conv_b": [], "gamma": [], "beta": [], "mean": [], "var": []}
    for _ in DILATIONS:
        key, kw, kb, kg, kbe, km, kv = jax.random.split(key, 7)
        params["w"].append(0.1 * jax.random.normal(kw, (hid_channels, num_channels, 3, 3), jnp.float32))
        params["conv_b"].append(0.1 * jax.random.normal(kb, (hid_channels,), jnp.float32))
        params["gamma"].append(1.0 + 0.1 * jax.random.normal(kg, (hid_channels,), jnp.float32))
        params["beta"].append(0.1 * jax.random.normal(kbe, (hid_channels,), jnp.float32))
        params["mean"].append(0.1 * jax.random.normal(km, (hid_channels,), jnp.float32))
        params["var"].append(0.5 + jnp.abs(jax.random.normal(kv, (hid_channels,), jnp.float32)))
    return params


if __name__ == "__main__":
    key = jax.random.PRNGKey(0)
    kx, kp = jax.random.split(key)
    N, C, H, W, HID = 2, 4, 16, 16, 8
    x = jax.random.normal(kx, (N, C, H, W), jnp.float32)
    params = _make_params(kp, C, HID)

    out = dilate_odd_block(x, params)
    out = jax.block_until_ready(out)

    ref = _reference(x, params)
    assert out.shape == (N, 3 * HID, H, W), out.shape
    # bf16 matmul operands (f32 accumulation) -> slightly looser tolerance than pure f32.
    max_err = float(jnp.max(jnp.abs(out - ref)))
    assert jnp.allclose(out, ref, atol=5e-2, rtol=5e-2), max_err
    print("KERNEL_OK")
</pallas_src>

<mosaic_0001>
module attributes {stable_mosaic.version = 11 : i64} {
  func.func @_dilate_odd_kernel(%arg0: i32, %arg1: memref<1x4x512xf32, #tpu.memory_space<vmem>>, %arg2: memref<3x8x36xbf16, #tpu.memory_space<vmem>>, %arg3: memref<3x8x1xf32, #tpu.memory_space<vmem>>, %arg4: memref<27x256xf32, #tpu.memory_space<vmem>>, %arg5: memref<1x24x256xf32, #tpu.memory_space<vmem>>, %arg6: memref<3x36x256xbf16, #tpu.memory_space<vmem>>) attributes {dimension_semantics = [#tpu.dimension_semantics<parallel>], iteration_bounds = array<i64: 2>, scalar_prefetch = 0 : i64, scratch_operands = 1 : i64, tpu.core_type = #tpu.core_type<tc>, window_params = [{transform_indices = @transform_0, window_bounds = array<i64: 1, 4, 512>}, {pipeline_mode = #tpu.pipeline_mode<synchronous>, transform_indices = @transform_1, window_bounds = array<i64: 3, 8, 36>}, {pipeline_mode = #tpu.pipeline_mode<synchronous>, transform_indices = @transform_2, window_bounds = array<i64: 3, 8, 1>}, {pipeline_mode = #tpu.pipeline_mode<synchronous>, transform_indices = @transform_3, window_bounds = array<i64: 27, 256>}, {transform_indices = @transform_4, window_bounds = array<i64: 1, 24, 256>}]} {
    %c0 = arith.constant 0 : index
    %c0_0 = arith.constant 0 : index
    %c77 = arith.constant 77 : index
    %0 = vector.load %arg1[%c0, %c0_0, %c77] : memref<1x4x512xf32, #tpu.memory_space<vmem>>, vector<1x4x256xf32>
    %1 = vector.shape_cast %0 : vector<1x4x256xf32> to vector<4x256xf32>
    %c0_1 = arith.constant 0 : index
    %c0_2 = arith.constant 0 : index
    %2 = vector.load %arg4[%c0_1, %c0_2] : memref<27x256xf32, #tpu.memory_space<vmem>>, vector<1x256xf32>
    %3 = vector.shape_cast %2 : vector<1x256xf32> to vector<256xf32>
    %4 = vector.shape_cast %3 : vector<256xf32> to vector<1x256xf32>
    %5 = vector.broadcast %4 : vector<1x256xf32> to vector<4x256xf32>
    %6 = arith.mulf %1, %5 : vector<4x256xf32>
    %7 = arith.truncf %6 : vector<4x256xf32> to vector<4x256xbf16>
    %c0_3 = arith.constant 0 : index
    %c0_4 = arith.constant 0 : index
    %c0_5 = arith.constant 0 : index
    %8 = vector.load %arg6[%c0_3, %c0_4, %c0_5] : memref<3x36x256xbf16, #tpu.memory_space<vmem>>, vector<1x4x256xbf16>
    %9 = vector.shape_cast %8 : vector<1x4x256xbf16> to vector<4x256xbf16>
    %10 = vector.shape_cast %7 : vector<4x256xbf16> to vector<1x4x256xbf16>
    tpu.vector_store %arg6[%c0_3, %c0_4, %c0_5], %10 {strides = array<i32>} : memref<3x36x256xbf16, #tpu.memory_space<vmem>>, vector<1x4x256xbf16>,
    %c0_6 = arith.constant 0 : index
    %c0_7 = arith.constant 0 : index
    %c80 = arith.constant 80 : index
    %11 = vector.load %arg1[%c0_6, %c0_7, %c80] : memref<1x4x512xf32, #tpu.memory_space<vmem>>, vector<1x4x256xf32>
    %12 = vector.shape_cast %11 : vector<1x4x256xf32> to vector<4x256xf32>
    %c1 = arith.constant 1 : index
    %c0_8 = arith.constant 0 : index
    %13 = vector.load %arg4[%c1, %c0_8] : memref<27x256xf32, #tpu.memory_space<vmem>>, vector<1x256xf32>
    %14 = vector.shape_cast %13 : vector<1x256xf32> to vector<256xf32>
    %15 = vector.shape_cast %14 : vector<256xf32> to vector<1x256xf32>
    %16 = vector.broadcast %15 : vector<1x256xf32> to vector<4x256xf32>
    %17 = arith.mulf %12, %16 : vector<4x256xf32>
    %18 = arith.truncf %17 : vector<4x256xf32> to vector<4x256xbf16>
    %c0_9 = arith.constant 0 : index
    %c4 = arith.constant 4 : index
    %c0_10 = arith.constant 0 : index
    %19 = vector.load %arg6[%c0_9, %c4, %c0_10] : memref<3x36x256xbf16, #tpu.memory_space<vmem>>, vector<1x4x256xbf16>
    %20 = vector.shape_cast %19 : vector<1x4x256xbf16> to vector<4x256xbf16>
    %21 = vector.shape_cast %18 : vector<4x256xbf16> to vector<1x4x256xbf16>
    tpu.vector_store %arg6[%c0_9, %c4, %c0_10], %21 {strides = array<i32>} : memref<3x36x256xbf16, #tpu.memory_space<vmem>>, vector<1x4x256xbf16>,
    %c0_11 = arith.constant 0 : index
    %c0_12 = arith.constant 0 : index
    %c83 = arith.constant 83 : index
    %22 = vector.load %arg1[%c0_11, %c0_12, %c83] : memref<1x4x512xf32, #tpu.memory_space<vmem>>, vector<1x4x256xf32>
    %23 = vector.shape_cast %22 : vector<1x4x256xf32> to vector<4x256xf32>
    %c2 = arith.constant 2 : index
    %c0_13 = arith.constant 0 : index
    %24 = vector.load %arg4[%c2, %c0_13] : memref<27x256xf32, #tpu.memory_space<vmem>>, vector<1x256xf32>
    %25 = vector.shape_cast %24 : vector<1x256xf32> to vector<256xf32>
    %26 = vector.shape_cast %25 : vector<256xf32> to vector<1x256xf32>
    %27 = vector.broadcast %26 : vector<1x256xf32> to vector<4x256xf32>
    %28 = arith.mulf %23, %27 : vector<4x256xf32>
    %29 = arith.truncf %28 : vector<4x256xf32> to vector<4x256xbf16>
    %c0_14 = arith.constant 0 : index
    %c8 = arith.constant 8 : index
    %c0_15 = arith.constant 0 : index
    %30 = vector.load %arg6[%c0_14, %c8, %c0_15] : memref<3x36x256xbf16, #tpu.memory_space<vmem>>, vector<1x4x256xbf16>
    %31 = vector.shape_cast %30 : vector<1x4x256xbf16> to vector<4x256xbf16>
    %32 = vector.shape_cast %29 : vector<4x256xbf16> to vector<1x4x256xbf16>
    tpu.vector_store %arg6[%c0_14, %c8, %c0_15], %32 {strides = array<i32>} : memref<3x36x256xbf16, #tpu.memory_space<vmem>>, vector<1x4x256xbf16>,
    %c0_16 = arith.constant 0 : index
    %c0_17 = arith.constant 0 : index
    %c125 = arith.constant 125 : index
    %33 = vector.load %arg1[%c0_16, %c0_17, %c125] : memref<1x4x512xf32, #tpu.memory_space<vmem>>, vector<1x4x256xf32>
    %34 = vector.shape_cast %33 : vector<1x4x256xf32> to vector<4x256xf32>
    %c3 = arith.constant 3 : index
    %c0_18 = arith.constant 0 : index
    %35 = vector.load %arg4[%c3, %c0_18] : memref<27x256xf32, #tpu.memory_space<vmem>>, vector<1x256xf32>
    %36 = vector.shape_cast %35 : vector<1x256xf32> to vector<256xf32>
    %37 = vector.shape_cast %36 : vector<256xf32> to vector<1x256xf32>
    %38 = vector.broadcast %37 : vector<1x256xf32> to vector<4x256xf32>
    %39 = arith.mulf %34, %38 : vector<4x256xf32>
    %40 = arith.truncf %39 : vector<4x256xf32> to vector<4x256xbf16>
    %c0_19 = arith.constant 0 : index
    %c12 = arith.constant 12 : index
    %c0_20 = arith.constant 0 : index
    %41 = vector.load %arg6[%c0_19, %c12, %c0_20] : memref<3x36x256xbf16, #tpu.memory_space<vmem>>, vector<1x4x256xbf16>
    %42 = vector.shape_cast %41 : vector<1x4x256xbf16> to vector<4x256xbf16>
    %43 = vector.shape_cast %40 : vector<4x256xbf16> to vector<1x4x256xbf16>
    tpu.vector_store %arg6[%c0_19, %c12, %c0_20], %43 {strides = array<i32>} : memref<3x36x256xbf16, #tpu.memory_space<vmem>>, vector<1x4x256xbf16>,
    %c0_21 = arith.constant 0 : index
    %c0_22 = arith.constant 0 : index
    %c128 = arith.constant 128 : index
    %44 = vector.load %arg1[%c0_21, %c0_22, %c128] : memref<1x4x512xf32, #tpu.memory_space<vmem>>, vector<1x4x256xf32>
    %45 = vector.shape_cast %44 : vector<1x4x256xf32> to vector<4x256xf32>
    %c4_23 = arith.constant 4 : index
    %c0_24 = arith.constant 0 : index
    %46 = vector.load %arg4[%c4_23, %c0_24] : memref<27x256xf32, #tpu.memory_space<vmem>>, vector<1x256xf32>
    %47 = vector.shape_cast %46 : vector<1x256xf32> to vector<256xf32>
    %48 = vector.shape_cast %47 : vector<256xf32> to vector<1x256xf32>
    %49 = vector.broadcast %48 : vector<1x256xf32> to vector<4x256xf32>
    %50 = arith.mulf %45, %49 : vector<4x256xf32>
    %51 = arith.truncf %50 : vector<4x256xf32> to vector<4x256xbf16>
    %c0_25 = arith.constant 0 : index
    %c16 = arith.constant 16 : index
    %c0_26 = arith.constant 0 : index
    %52 = vector.load %arg6[%c0_25, %c16, %c0_26] : memref<3x36x256xbf16, #tpu.memory_space<vmem>>, vector<1x4x256xbf16>
    %53 = vector.shape_cast %52 : vector<1x4x256xbf16> to vector<4x256xbf16>
    %54 = vector.shape_cast %51 : vector<4x256xbf16> to vector<1x4x256xbf16>
    tpu.vector_store %arg6[%c0_25, %c16, %c0_26], %54 {strides = array<i32>} : memref<3x36x256xbf16, #tpu.memory_space<vmem>>, vector<1x4x256xbf16>,
    %c0_27 = arith.constant 0 : index
    %c0_28 = arith.constant 0 : index
    %c131 = arith.constant 131 : index
    %55 = vector.load %arg1[%c0_27, %c0_28, %c131] : memref<1x4x512xf32, #tpu.memory_space<vmem>>, vector<1x4x256xf32>
    %56 = vector.shape_cast %55 : vector<1x4x256xf32> to vector<4x256xf32>
    %c5 = arith.constant 5 : index
    %c0_29 = arith.constant 0 : index
    %57 = vector.load %arg4[%c5, %c0_29] : memref<27x256xf32, #tpu.memory_space<vmem>>, vector<1x256xf32>
    %58 = vector.shape_cast %57 : vector<1x256xf32> to vector<256xf32>
    %59 = vector.shape_cast %58 : vector<256xf32> to vector<1x256xf32>
    %60 = vector.broadcast %59 : vector<1x256xf32> to vector<4x256xf32>
    %61 = arith.mulf %56, %60 : vector<4x256xf32>
    %62 = arith.truncf %61 : vector<4x256xf32> to vector<4x256xbf16>
    %c0_30 = arith.constant 0 : index
    %c20 = arith.constant 20 : index
    %c0_31 = arith.constant 0 : index
    %63 = vector.load %arg6[%c0_30, %c20, %c0_31] : memref<3x36x256xbf16, #tpu.memory_space<vmem>>, vector<1x4x256xbf16>
    %64 = vector.shape_cast %63 : vector<1x4x256xbf16> to vector<4x256xbf16>
    %65 = vector.shape_cast %62 : vector<4x256xbf16> to vector<1x4x256xbf16>
    tpu.vector_store %arg6[%c0_30, %c20, %c0_31], %65 {strides = array<i32>} : memref<3x36x256xbf16, #tpu.memory_space<vmem>>, vector<1x4x256xbf16>,
    %c0_32 = arith.constant 0 : index
    %c0_33 = arith.constant 0 : index
    %c173 = arith.constant 173 : index
    %66 = vector.load %arg1[%c0_32, %c0_33, %c173] : memref<1x4x512xf32, #tpu.memory_space<vmem>>, vector<1x4x256xf32>
    %67 = vector.shape_cast %66 : vector<1x4x256xf32> to vector<4x256xf32>
    %c6 = arith.constant 6 : index
    %c0_34 = arith.constant 0 : index
    %68 = vector.load %arg4[%c6, %c0_34] : memref<27x256xf32, #tpu.memory_space<vmem>>, vector<1x256xf32>
    %69 = vector.shape_cast %68 : vector<1x256xf32> to vector<256xf32>
    %70 = vector.shape_cast %69 : vector<256xf32> to vector<1x256xf32>
    %71 = vector.broadcast %70 : vector<1x256xf32> to vector<4x256xf32>
    %72 = arith.mulf %67, %71 : vector<4x256xf32>
    %73 = arith.truncf %72 : vector<4x256xf32> to vector<4x256xbf16>
    %c0_35 = arith.constant 0 : index
    %c24 = arith.constant 24 : index
    %c0_36 = arith.constant 0 : index
    %74 = vector.load %arg6[%c0_35, %c24, %c0_36] : memref<3x36x256xbf16, #tpu.memory_space<vmem>>, vector<1x4x256xbf16>
    %75 = vector.shape_cast %74 : vector<1x4x256xbf16> to vector<4x256xbf16>
    %76 = vector.shape_cast %73 : vector<4x256xbf16> to vector<1x4x256xbf16>
    tpu.vector_store %arg6[%c0_35, %c24, %c0_36], %76 {strides = array<i32>} : memref<3x36x256xbf16, #tpu.memory_space<vmem>>, vector<1x4x256xbf16>,
    %c0_37 = arith.constant 0 : index
    %c0_38 = arith.constant 0 : index
    %c176 = arith.constant 176 : index
    %77 = vector.load %arg1[%c0_37, %c0_38, %c176] : memref<1x4x512xf32, #tpu.memory_space<vmem>>, vector<1x4x256xf32>
    %78 = vector.shape_cast %77 : vector<1x4x256xf32> to vector<4x256xf32>
    %c7 = arith.constant 7 : index
    %c0_39 = arith.constant 0 : index
    %79 = vector.load %arg4[%c7, %c0_39] : memref<27x256xf32, #tpu.memory_space<vmem>>, vector<1x256xf32>
    %80 = vector.shape_cast %79 : vector<1x256xf32> to vector<256xf32>
    %81 = vector.shape_cast %80 : vector<256xf32> to vector<1x256xf32>
    %82 = vector.broadcast %81 : vector<1x256xf32> to vector<4x256xf32>
    %83 = arith.mulf %78, %82 : vector<4x256xf32>
    %84 = arith.truncf %83 : vector<4x256xf32> to vector<4x256xbf16>
    %c0_40 = arith.constant 0 : index
    %c28 = arith.constant 28 : index
    %c0_41 = arith.constant 0 : index
    %85 = vector.load %arg6[%c0_40, %c28, %c0_41] : memref<3x36x256xbf16, #tpu.memory_space<vmem>>, vector<1x4x256xbf16>
    %86 = vector.shape_cast %85 : vector<1x4x256xbf16> to vector<4x256xbf16>
    %87 = vector.shape_cast %84 : vector<4x256xbf16> to vector<1x4x256xbf16>
    tpu.vector_store %arg6[%c0_40, %c28, %c0_41], %87 {strides = array<i32>} : memref<3x36x256xbf16, #tpu.memory_space<vmem>>, vector<1x4x256xbf16>,
    %c0_42 = arith.constant 0 : index
    %c0_43 = arith.constant 0 : index
    %c179 = arith.constant 179 : index
    %88 = vector.load %arg1[%c0_42, %c0_43, %c179] : memref<1x4x512xf32, #tpu.memory_space<vmem>>, vector<1x4x256xf32>
    %89 = vector.shape_cast %88 : vector<1x4x256xf32> to vector<4x256xf32>
    %c8_44 = arith.constant 8 : index
    %c0_45 = arith.constant 0 : index
    %90 = vector.load %arg4[%c8_44, %c0_45] : memref<27x256xf32, #tpu.memory_space<vmem>>, vector<1x256xf32>
    %91 = vector.shape_cast %90 : vector<1x256xf32> to vector<256xf32>
    %92 = vector.shape_cast %91 : vector<256xf32> to vector<1x256xf32>
    %93 = vector.broadcast %92 : vector<1x256xf32> to vector<4x256xf32>
    %94 = arith.mulf %89, %93 : vector<4x256xf32>
    %95 = arith.truncf %94 : vector<4x256xf32> to vector<4x256xbf16>
    %c0_46 = arith.constant 0 : index
    %c32 = arith.constant 32 : index
    %c0_47 = arith.constant 0 : index
    %96 = vector.load %arg6[%c0_46, %c32, %c0_47] : memref<3x36x256xbf16, #tpu.memory_space<vmem>>, vector<1x4x256xbf16>
    %97 = vector.shape_cast %96 : vector<1x4x256xbf16> to vector<4x256xbf16>
    %98 = vector.shape_cast %95 : vector<4x256xbf16> to vector<1x4x256xbf16>
    tpu.vector_store %arg6[%c0_46, %c32, %c0_47], %98 {strides = array<i32>} : memref<3x36x256xbf16, #tpu.memory_space<vmem>>, vector<1x4x256xbf16>,
    %c0_48 = arith.constant 0 : index
    %c0_49 = arith.constant 0 : index
    %c0_50 = arith.constant 0 : index
    %99 = vector.load %arg2[%c0_48, %c0_49, %c0_50] : memref<3x8x36xbf16, #tpu.memory_space<vmem>>, vector<1x8x36xbf16>
    %100 = vector.shape_cast %99 : vector<1x8x36xbf16> to vector<8x36xbf16>
    %c0_51 = arith.constant 0 : index
    %c0_52 = arith.constant 0 : index
    %c0_53 = arith.constant 0 : index
    %101 = vector.load %arg6[%c0_51, %c0_52, %c0_53] : memref<3x36x256xbf16, #tpu.memory_space<vmem>>, vector<1x36x256xbf16>
    %102 = vector.shape_cast %101 : vector<1x36x256xbf16> to vector<36x256xbf16>
    %cst = arith.constant dense<0.000000e+00> : vector<8x256xf32>
    %103 = tpu.matmul %100, %102, %cst {dimension_numbers = #tpu.dot_dimension_numbers<[1], [0], [0], [1], [0, 0, 1, 1], [], []>} : vector<8x36xbf16>, vector<36x256xbf16>, vector<8x256xf32> -> vector<8x256xf32>
    %c0_54 = arith.constant 0 : index
    %c0_55 = arith.constant 0 : index
    %c0_56 = arith.constant 0 : index
    %104 = vector.load %arg3[%c0_54, %c0_55, %c0_56] : memref<3x8x1xf32, #tpu.memory_space<vmem>>, vector<1x8x1xf32>
    %105 = vector.shape_cast %104 : vector<1x8x1xf32> to vector<8x1xf32>
    %106 = vector.broadcast %105 : vector<8x1xf32> to vector<8x256xf32>
    %107 = arith.addf %103, %106 : vector<8x256xf32>
    %cst_57 = arith.constant 0.000000e+00 : f32
    %108 = vector.broadcast %cst_57 : f32 to vector<8x256xf32>
    %109 = arith.maximumf %107, %108 : vector<8x256xf32>
    %c0_58 = arith.constant 0 : index
    %c0_59 = arith.constant 0 : index
    %c0_60 = arith.constant 0 : index
    %110 = vector.load %arg5[%c0_58, %c0_59, %c0_60] : memref<1x24x256xf32, #tpu.memory_space<vmem>>, vector<1x8x256xf32>
    %111 = vector.shape_cast %110 : vector<1x8x256xf32> to vector<8x256xf32>
    %112 = vector.shape_cast %109 : vector<8x256xf32> to vector<1x8x256xf32>
    tpu.vector_store %arg5[%c0_58, %c0_59, %c0_60], %112 {strides = array<i32>} : memref<1x24x256xf32, #tpu.memory_space<vmem>>, vector<1x8x256xf32>,
    %c0_61 = arith.constant 0 : index
    %c0_62 = arith.constant 0 : index
    %c43 = arith.constant 43 : index
    %113 = vector.load %arg1[%c0_61, %c0_62, %c43] : memref<1x4x512xf32, #tpu.memory_space<vmem>>, vector<1x4x256xf32>
    %114 = vector.shape_cast %113 : vector<1x4x256xf32> to vector<4x256xf32>
    %c9 = arith.constant 9 : index
    %c0_63 = arith.constant 0 : index
    %115 = vector.load %arg4[%c9, %c0_63] : memref<27x256xf32, #tpu.memory_space<vmem>>, vector<1x256xf32>
    %116 = vector.shape_cast %115 : vector<1x256xf32> to vector<256xf32>
    %117 = vector.shape_cast %116 : vector<256xf32> to vector<1x256xf32>
    %118 = vector.broadcast %117 : vector<1x256xf32> to vector<4x256xf32>
    %119 = arith.mulf %114, %118 : vector<4x256xf32>
    %120 = arith.truncf %119 : vector<4x256xf32> to vector<4x256xbf16>
    %c1_64 = arith.constant 1 : index
    %c0_65 = arith.constant 0 : index
    %c0_66 = arith.constant 0 : index
    %121 = vector.load %arg6[%c1_64, %c0_65, %c0_66] : memref<3x36x256xbf16, #tpu.memory_space<vmem>>, vector<1x4x256xbf16>
    %122 = vector.shape_cast %121 : vector<1x4x256xbf16> to vector<4x256xbf16>
    %123 = vector.shape_cast %120 : vector<4x256xbf16> to vector<1x4x256xbf16>
    tpu.vector_store %arg6[%c1_64, %c0_65, %c0_66], %123 {strides = array<i32>} : memref<3x36x256xbf16, #tpu.memory_space<vmem>>, vector<1x4x256xbf16>,
    %c0_67 = arith.constant 0 : index
    %c0_68 = arith.constant 0 : index
    %c48 = arith.constant 48 : index
    %124 = vector.load %arg1[%c0_67, %c0_68, %c48] : memref<1x4x512xf32, #tpu.memory_space<vmem>>, vector<1x4x256xf32>
    %125 = vector.shape_cast %124 : vector<1x4x256xf32> to vector<4x256xf32>
    %c10 = arith.constant 10 : index
    %c0_69 = arith.constant 0 : index
    %126 = vector.load %arg4[%c10, %c0_69] : memref<27x256xf32, #tpu.memory_space<vmem>>, vector<1x256xf32>
    %127 = vector.shape_cast %126 : vector<1x256xf32> to vector<256xf32>
    %128 = vector.shape_cast %127 : vector<256xf32> to vector<1x256xf32>
    %129 = vector.broadcast %128 : vector<1x256xf32> to vector<4x256xf32>
    %130 = arith.mulf %125, %129 : vector<4x256xf32>
    %131 = arith.truncf %130 : vector<4x256xf32> to vector<4x256xbf16>
    %c1_70 = arith.constant 1 : index
    %c4_71 = arith.constant 4 : index
    %c0_72 = arith.constant 0 : index
    %132 = vector.load %arg6[%c1_70, %c4_71, %c0_72] : memref<3x36x256xbf16, #tpu.memory_space<vmem>>, vector<1x4x256xbf16>
    %133 = vector.shape_cast %132 : vector<1x4x256xbf16> to vector<4x256xbf16>
    %134 = vector.shape_cast %131 : vector<4x256xbf16> to vector<1x4x256xbf16>
    tpu.vector_store %arg6[%c1_70, %c4_71, %c0_72], %134 {strides = array<i32>} : memref<3x36x256xbf16, #tpu.memory_space<vmem>>, vector<1x4x256xbf16>,
    %c0_73 = arith.constant 0 : index
    %c0_74 = arith.constant 0 : index
    %c53 = arith.constant 53 : index
    %135 = vector.load %arg1[%c0_73, %c0_74, %c53] : memref<1x4x512xf32, #tpu.memory_space<vmem>>, vector<1x4x256xf32>
    %136 = vector.shape_cast %135 : vector<1x4x256xf32> to vector<4x256xf32>
    %c11 = arith.constant 11 : index
    %c0_75 = arith.constant 0 : index
    %137 = vector.load %arg4[%c11, %c0_75] : memref<27x256xf32, #tpu.memory_space<vmem>>, vector<1x256xf32>
    %138 = vector.shape_cast %137 : vector<1x256xf32> to vector<256xf32>
    %139 = vector.shape_cast %138 : vector<256xf32> to vector<1x256xf32>
    %140 = vector.broadcast %139 : vector<1x256xf32> to vector<4x256xf32>
    %141 = arith.mulf %136, %140 : vector<4x256xf32>
    %142 = arith.truncf %141 : vector<4x256xf32> to vector<4x256xbf16>
    %c1_76 = arith.constant 1 : index
    %c8_77 = arith.constant 8 : index
    %c0_78 = arith.constant 0 : index
    %143 = vector.load %arg6[%c1_76, %c8_77, %c0_78] : memref<3x36x256xbf16, #tpu.memory_space<vmem>>, vector<1x4x256xbf16>
    %144 = vector.shape_cast %143 : vector<1x4x256xbf16> to vector<4x256xbf16>
    %145 = vector.shape_cast %142 : vector<4x256xbf16> to vector<1x4x256xbf16>
    tpu.vector_store %arg6[%c1_76, %c8_77, %c0_78], %145 {strides = array<i32>} : memref<3x36x256xbf16, #tpu.memory_space<vmem>>, vector<1x4x256xbf16>,
    %c0_79 = arith.constant 0 : index
    %c0_80 = arith.constant 0 : index
    %c123 = arith.constant 123 : index
    %146 = vector.load %arg1[%c0_79, %c0_80, %c123] : memref<1x4x512xf32, #tpu.memory_space<vmem>>, vector<1x4x256xf32>
    %147 = vector.shape_cast %146 : vector<1x4x256xf32> to vector<4x256xf32>
    %c12_81 = arith.constant 12 : index
    %c0_82 = arith.constant 0 : index
    %148 = vector.load %arg4[%c12_81, %c0_82] : memref<27x256xf32, #tpu.memory_space<vmem>>, vector<1x256xf32>
    %149 = vector.shape_cast %148 : vector<1x256xf32> to vector<256xf32>
    %150 = vector.shape_cast %149 : vector<256xf32> to vector<1x256xf32>
    %151 = vector.broadcast %150 : vector<1x256xf32> to vector<4x256xf32>
    %152 = arith.mulf %147, %151 : vector<4x256xf32>
    %153 = arith.truncf %152 : vector<4x256xf32> to vector<4x256xbf16>
    %c1_83 = arith.constant 1 : index
    %c12_84 = arith.constant 12 : index
    %c0_85 = arith.constant 0 : index
    %154 = vector.load %arg6[%c1_83, %c12_84, %c0_85] : memref<3x36x256xbf16, #tpu.memory_space<vmem>>, vector<1x4x256xbf16>
    %155 = vector.shape_cast %154 : vector<1x4x256xbf16> to vector<4x256xbf16>
    %156 = vector.shape_cast %153 : vector<4x256xbf16> to vector<1x4x256xbf16>
    tpu.vector_store %arg6[%c1_83, %c12_84, %c0_85], %156 {strides = array<i32>} : memref<3x36x256xbf16, #tpu.memory_space<vmem>>, vector<1x4x256xbf16>,
    %c0_86 = arith.constant 0 : index
    %c0_87 = arith.constant 0 : index
    %c128_88 = arith.constant 128 : index
    %157 = vector.load %arg1[%c0_86, %c0_87, %c128_88] : memref<1x4x512xf32, #tpu.memory_space<vmem>>, vector<1x4x256xf32>
    %158 = vector.shape_cast %157 : vector<1x4x256xf32> to vector<4x256xf32>
    %c13 = arith.constant 13 : index
    %c0_89 = arith.constant 0 : index
    %159 = vector.load %arg4[%c13, %c0_89] : memref<27x256xf32, #tpu.memory_space<vmem>>, vector<1x256xf32>
    %160 = vector.shape_cast %159 : vector<1x256xf32> to vector<256xf32>
    %161 = vector.shape_cast %160 : vector<256xf32> to vector<1x256xf32>
    %162 = vector.broadcast %161 : vector<1x256xf32> to vector<4x256xf32>
    %163 = arith.mulf %158, %162 : vector<4x256xf32>
    %164 = arith.truncf %163 : vector<4x256xf32> to vector<4x256xbf16>
    %c1_90 = arith.constant 1 : index
    %c16_91 = arith.constant 16 : index
    %c0_92 = arith.constant 0 : index
    %165 = vector.load %arg6[%c1_90, %c16_91, %c0_92] : memref<3x36x256xbf16, #tpu.memory_space<vmem>>, vector<1x4x256xbf16>
    %166 = vector.shape_cast %165 : vector<1x4x256xbf16> to vector<4x256xbf16>
    %167 = vector.shape_cast %164 : vector<4x256xbf16> to vector<1x4x256xbf16>
    tpu.vector_store %arg6[%c1_90, %c16_91, %c0_92], %167 {strides = array<i32>} : memref<3x36x256xbf16, #tpu.memory_space<vmem>>, vector<1x4x256xbf16>,
    %c0_93 = arith.constant 0 : index
    %c0_94 = arith.constant 0 : index
    %c133 = arith.constant 133 : index
    %168 = vector.load %arg1[%c0_93, %c0_94, %c133] : memref<1x4x512xf32, #tpu.memory_space<vmem>>, vector<1x4x256xf32>
    %169 = vector.shape_cast %168 : vector<1x4x256xf32> to vector<4x256xf32>
    %c14 = arith.constant 14 : index
    %c0_95 = arith.constant 0 : index
    %170 = vector.load %arg4[%c14, %c0_95] : memref<27x256xf32, #tpu.memory_space<vmem>>, vector<1x256xf32>
    %171 = vector.shape_cast %170 : vector<1x256xf32> to vector<256xf32>
    %172 = vector.shape_cast %171 : vector<256xf32> to vector<1x256xf32>
    %173 = vector.broadcast %172 : vector<1x256xf32> to vector<4x256xf32>
    %174 = arith.mulf %169, %173 : vector<4x256xf32>
    %175 = arith.truncf %174 : vector<4x256xf32> to vector<4x256xbf16>
    %c1_96 = arith.constant 1 : index
    %c20_97 = arith.constant 20 : index
    %c0_98 = arith.constant 0 : index
    %176 = vector.load %arg6[%c1_96, %c20_97, %c0_98] : memref<3x36x256xbf16, #tpu.memory_space<vmem>>, vector<1x4x256xbf16>
    %177 = vector.shape_cast %176 : vector<1x4x256xbf16> to vector<4x256xbf16>
    %178 = vector.shape_cast %175 : vector<4x256xbf16> to vector<1x4x256xbf16>
    tpu.vector_store %arg6[%c1_96, %c20_97, %c0_98], %178 {strides = array<i32>} : memref<3x36x256xbf16, #tpu.memory_space<vmem>>, vector<1x4x256xbf16>,
    %c0_99 = arith.constant 0 : index
    %c0_100 = arith.constant 0 : index
    %c203 = arith.constant 203 : index
    %179 = vector.load %arg1[%c0_99, %c0_100, %c203] : memref<1x4x512xf32, #tpu.memory_space<vmem>>, vector<1x4x256xf32>
    %180 = vector.shape_cast %179 : vector<1x4x256xf32> to vector<4x256xf32>
    %c15 = arith.constant 15 : index
    %c0_101 = arith.constant 0 : index
    %181 = vector.load %arg4[%c15, %c0_101] : memref<27x256xf32, #tpu.memory_space<vmem>>, vector<1x256xf32>
    %182 = vector.shape_cast %181 : vector<1x256xf32> to vector<256xf32>
    %183 = vector.shape_cast %182 : vector<256xf32> to vector<1x256xf32>
    %184 = vector.broadcast %183 : vector<1x256xf32> to vector<4x256xf32>
    %185 = arith.mulf %180, %184 : vector<4x256xf32>
    %186 = arith.truncf %185 : vector<4x256xf32> to vector<4x256xbf16>
    %c1_102 = arith.constant 1 : index
    %c24_103 = arith.constant 24 : index
    %c0_104 = arith.constant 0 : index
    %187 = vector.load %arg6[%c1_102, %c24_103, %c0_104] : memref<3x36x256xbf16, #tpu.memory_space<vmem>>, vector<1x4x256xbf16>
    %188 = vector.shape_cast %187 : vector<1x4x256xbf16> to vector<4x256xbf16>
    %189 = vector.shape_cast %186 : vector<4x256xbf16> to vector<1x4x256xbf16>
    tpu.vector_store %arg6[%c1_102, %c24_103, %c0_104], %189 {strides = array<i32>} : memref<3x36x256xbf16, #tpu.memory_space<vmem>>, vector<1x4x256xbf16>,
    %c0_105 = arith.constant 0 : index
    %c0_106 = arith.constant 0 : index
    %c208 = arith.constant 208 : index
    %190 = vector.load %arg1[%c0_105, %c0_106, %c208] : memref<1x4x512xf32, #tpu.memory_space<vmem>>, vector<1x4x256xf32>
    %191 = vector.shape_cast %190 : vector<1x4x256xf32> to vector<4x256xf32>
    %c16_107 = arith.constant 16 : index
    %c0_108 = arith.constant 0 : index
    %192 = vector.load %arg4[%c16_107, %c0_108] : memref<27x256xf32, #tpu.memory_space<vmem>>, vector<1x256xf32>
    %193 = vector.shape_cast %192 : vector<1x256xf32> to vector<256xf32>
    %194 = vector.shape_cast %193 : vector<256xf32> to vector<1x256xf32>
    %195 = vector.broadcast %194 : vector<1x256xf32> to vector<4x256xf32>
    %196 = arith.mulf %191, %195 : vector<4x256xf32>
    %197 = arith.truncf %196 : vector<4x256xf32> to vector<4x256xbf16>
    %c1_109 = arith.constant 1 : index
    %c28_110 = arith.constant 28 : index
    %c0_111 = arith.constant 0 : index
    %198 = vector.load %arg6[%c1_109, %c28_110, %c0_111] : memref<3x36x256xbf16, #tpu.memory_space<vmem>>, vector<1x4x256xbf16>
    %199 = vector.shape_cast %198 : vector<1x4x256xbf16> to vector<4x256xbf16>
    %200 = vector.shape_cast %197 : vector<4x256xbf16> to vector<1x4x256xbf16>
    tpu.vector_store %arg6[%c1_109, %c28_110, %c0_111], %200 {strides = array<i32>} : memref<3x36x256xbf16, #tpu.memory_space<vmem>>, vector<1x4x256xbf16>,
    %c0_112 = arith.constant 0 : index
    %c0_113 = arith.constant 0 : index
    %c213 = arith.constant 213 : index
    %201 = vector.load %arg1[%c0_112, %c0_113, %c213] : memref<1x4x512xf32, #tpu.memory_space<vmem>>, vector<1x4x256xf32>
    %202 = vector.shape_cast %201 : vector<1x4x256xf32> to vector<4x256xf32>
    %c17 = arith.constant 17 : index
    %c0_114 = arith.constant 0 : index
    %203 = vector.load %arg4[%c17, %c0_114] : memref<27x256xf32, #tpu.memory_space<vmem>>, vector<1x256xf32>
    %204 = vector.shape_cast %203 : vector<1x256xf32> to vector<256xf32>
    %205 = vector.shape_cast %204 : vector<256xf32> to vector<1x256xf32>
    %206 = vector.broadcast %205 : vector<1x256xf32> to vector<4x256xf32>
    %207 = arith.mulf %202, %206 : vector<4x256xf32>
    %208 = arith.truncf %207 : vector<4x256xf32> to vector<4x256xbf16>
    %c1_115 = arith.constant 1 : index
    %c32_116 = arith.constant 32 : index
    %c0_117 = arith.constant 0 : index
    %209 = vector.load %arg6[%c1_115, %c32_116, %c0_117] : memref<3x36x256xbf16, #tpu.memory_space<vmem>>, vector<1x4x256xbf16>
    %210 = vector.shape_cast %209 : vector<1x4x256xbf16> to vector<4x256xbf16>
    %211 = vector.shape_cast %208 : vector<4x256xbf16> to vector<1x4x256xbf16>
    tpu.vector_store %arg6[%c1_115, %c32_116, %c0_117], %211 {strides = array<i32>} : memref<3x36x256xbf16, #tpu.memory_space<vmem>>, vector<1x4x256xbf16>,
    %c1_118 = arith.constant 1 : index
    %c0_119 = arith.constant 0 : index
    %c0_120 = arith.constant 0 : index
    %212 = vector.load %arg2[%c1_118, %c0_119, %c0_120] : memref<3x8x36xbf16, #tpu.memory_space<vmem>>, vector<1x8x36xbf16>
    %213 = vector.shape_cast %212 : vector<1x8x36xbf16> to vector<8x36xbf16>
    %c1_121 = arith.constant 1 : index
    %c0_122 = arith.constant 0 : index
    %c0_123 = arith.constant 0 : index
    %214 = vector.load %arg6[%c1_121, %c0_122, %c0_123] : memref<3x36x256xbf16, #tpu.memory_space<vmem>>, vector<1x36x256xbf16>
    %215 = vector.shape_cast %214 : vector<1x36x256xbf16> to vector<36x256xbf16>
    %cst_124 = arith.constant dense<0.000000e+00> : vector<8x256xf32>
    %216 = tpu.matmul %213, %215, %cst_124 {dimension_numbers = #tpu.dot_dimension_numbers<[1], [0], [0], [1], [0, 0, 1, 1], [], []>} : vector<8x36xbf16>, vector<36x256xbf16>, vector<8x256xf32> -> vector<8x256xf32>
    %c1_125 = arith.constant 1 : index
    %c0_126 = arith.constant 0 : index
    %c0_127 = arith.constant 0 : index
    %217 = vector.load %arg3[%c1_125, %c0_126, %c0_127] : memref<3x8x1xf32, #tpu.memory_space<vmem>>, vector<1x8x1xf32>
    %218 = vector.shape_cast %217 : vector<1x8x1xf32> to vector<8x1xf32>
    %219 = vector.broadcast %218 : vector<8x1xf32> to vector<8x256xf32>
    %220 = arith.addf %216, %219 : vector<8x256xf32>
    %cst_128 = arith.constant 0.000000e+00 : f32
    %221 = vector.broadcast %cst_128 : f32 to vector<8x256xf32>
    %222 = arith.maximumf %220, %221 : vector<8x256xf32>
    %c0_129 = arith.constant 0 : index
    %c8_130 = arith.constant 8 : index
    %c0_131 = arith.constant 0 : index
    %223 = vector.load %arg5[%c0_129, %c8_130, %c0_131] : memref<1x24x256xf32, #tpu.memory_space<vmem>>, vector<1x8x256xf32>
    %224 = vector.shape_cast %223 : vector<1x8x256xf32> to vector<8x256xf32>
    %225 = vector.shape_cast %222 : vector<8x256xf32> to vector<1x8x256xf32>
    tpu.vector_store %arg5[%c0_129, %c8_130, %c0_131], %225 {strides = array<i32>} : memref<1x24x256xf32, #tpu.memory_space<vmem>>, vector<1x8x256xf32>,
    %c0_132 = arith.constant 0 : index
    %c0_133 = arith.constant 0 : index
    %c9_134 = arith.constant 9 : index
    %226 = vector.load %arg1[%c0_132, %c0_133, %c9_134] : memref<1x4x512xf32, #tpu.memory_space<vmem>>, vector<1x4x256xf32>
    %227 = vector.shape_cast %226 : vector<1x4x256xf32> to vector<4x256xf32>
    %c18 = arith.constant 18 : index
    %c0_135 = arith.constant 0 : index
    %228 = vector.load %arg4[%c18, %c0_135] : memref<27x256xf32, #tpu.memory_space<vmem>>, vector<1x256xf32>
    %229 = vector.shape_cast %228 : vector<1x256xf32> to vector<256xf32>
    %230 = vector.shape_cast %229 : vector<256xf32> to vector<1x256xf32>
    %231 = vector.broadcast %230 : vector<1x256xf32> to vector<4x256xf32>
    %232 = arith.mulf %227, %231 : vector<4x256xf32>
    %233 = arith.truncf %232 : vector<4x256xf32> to vector<4x256xbf16>
    %c2_136 = arith.constant 2 : index
    %c0_137 = arith.constant 0 : index
    %c0_138 = arith.constant 0 : index
    %234 = vector.load %arg6[%c2_136, %c0_137, %c0_138] : memref<3x36x256xbf16, #tpu.memory_space<vmem>>, vector<1x4x256xbf16>
    %235 = vector.shape_cast %234 : vector<1x4x256xbf16> to vector<4x256xbf16>
    %236 = vector.shape_cast %233 : vector<4x256xbf16> to vector<1x4x256xbf16>
    tpu.vector_store %arg6[%c2_136, %c0_137, %c0_138], %236 {strides = array<i32>} : memref<3x36x256xbf16, #tpu.memory_space<vmem>>, vector<1x4x256xbf16>,
    %c0_139 = arith.constant 0 : index
    %c0_140 = arith.constant 0 : index
    %c16_141 = arith.constant 16 : index
    %237 = vector.load %arg1[%c0_139, %c0_140, %c16_141] : memref<1x4x512xf32, #tpu.memory_space<vmem>>, vector<1x4x256xf32>
    %238 = vector.shape_cast %237 : vector<1x4x256xf32> to vector<4x256xf32>
    %c19 = arith.constant 19 : index
    %c0_142 = arith.constant 0 : index
    %239 = vector.load %arg4[%c19, %c0_142] : memref<27x256xf32, #tpu.memory_space<vmem>>, vector<1x256xf32>
    %240 = vector.shape_cast %239 : vector<1x256xf32> to vector<256xf32>
    %241 = vector.shape_cast %240 : vector<256xf32> to vector<1x256xf32>
    %242 = vector.broadcast %241 : vector<1x256xf32> to vector<4x256xf32>
    %243 = arith.mulf %238, %242 : vector<4x256xf32>
    %244 = arith.truncf %243 : vector<4x256xf32> to vector<4x256xbf16>
    %c2_143 = arith.constant 2 : index
    %c4_144 = arith.constant 4 : index
    %c0_145 = arith.constant 0 : index
    %245 = vector.load %arg6[%c2_143, %c4_144, %c0_145] : memref<3x36x256xbf16, #tpu.memory_space<vmem>>, vector<1x4x256xbf16>
    %246 = vector.shape_cast %245 : vector<1x4x256xbf16> to vector<4x256xbf16>
    %247 = vector.shape_cast %244 : vector<4x256xbf16> to vector<1x4x256xbf16>
    tpu.vector_store %arg6[%c2_143, %c4_144, %c0_145], %247 {strides = array<i32>} : memref<3x36x256xbf16, #tpu.memory_space<vmem>>, vector<1x4x256xbf16>,
    %c0_146 = arith.constant 0 : index
    %c0_147 = arith.constant 0 : index
    %c23 = arith.constant 23 : index
    %248 = vector.load %arg1[%c0_146, %c0_147, %c23] : memref<1x4x512xf32, #tpu.memory_space<vmem>>, vector<1x4x256xf32>
    %249 = vector.shape_cast %248 : vector<1x4x256xf32> to vector<4x256xf32>
    %c20_148 = arith.constant 20 : index
    %c0_149 = arith.constant 0 : index
    %250 = vector.load %arg4[%c20_148, %c0_149] : memref<27x256xf32, #tpu.memory_space<vmem>>, vector<1x256xf32>
    %251 = vector.shape_cast %250 : vector<1x256xf32> to vector<256xf32>
    %252 = vector.shape_cast %251 : vector<256xf32> to vector<1x256xf32>
    %253 = vector.broadcast %252 : vector<1x256xf32> to vector<4x256xf32>
    %254 = arith.mulf %249, %253 : vector<4x256xf32>
    %255 = arith.truncf %254 : vector<4x256xf32> to vector<4x256xbf16>
    %c2_150 = arith.constant 2 : index
    %c8_151 = arith.constant 8 : index
    %c0_152 = arith.constant 0 : index
    %256 = vector.load %arg6[%c2_150, %c8_151, %c0_152] : memref<3x36x256xbf16, #tpu.memory_space<vmem>>, vector<1x4x256xbf16>
    %257 = vector.shape_cast %256 : vector<1x4x256xbf16> to vector<4x256xbf16>
    %258 = vector.shape_cast %255 : vector<4x256xbf16> to vector<1x4x256xbf16>
    tpu.vector_store %arg6[%c2_150, %c8_151, %c0_152], %258 {strides = array<i32>} : memref<3x36x256xbf16, #tpu.memory_space<vmem>>, vector<1x4x256xbf16>,
    %c0_153 = arith.constant 0 : index
    %c0_154 = arith.constant 0 : index
    %c121 = arith.constant 121 : index
    %259 = vector.load %arg1[%c0_153, %c0_154, %c121] : memref<1x4x512xf32, #tpu.memory_space<vmem>>, vector<1x4x256xf32>
    %260 = vector.shape_cast %259 : vector<1x4x256xf32> to vector<4x256xf32>
    %c21 = arith.constant 21 : index
    %c0_155 = arith.constant 0 : index
    %261 = vector.load %arg4[%c21, %c0_155] : memref<27x256xf32, #tpu.memory_space<vmem>>, vector<1x256xf32>
    %262 = vector.shape_cast %261 : vector<1x256xf32> to vector<256xf32>
    %263 = vector.shape_cast %262 : vector<256xf32> to vector<1x256xf32>
    %264 = vector.broadcast %263 : vector<1x256xf32> to vector<4x256xf32>
    %265 = arith.mulf %260, %264 : vector<4x256xf32>
    %266 = arith.truncf %265 : vector<4x256xf32> to vector<4x256xbf16>
    %c2_156 = arith.constant 2 : index
    %c12_157 = arith.constant 12 : index
    %c0_158 = arith.constant 0 : index
    %267 = vector.load %arg6[%c2_156, %c12_157, %c0_158] : memref<3x36x256xbf16, #tpu.memory_space<vmem>>, vector<1x4x256xbf16>
    %268 = vector.shape_cast %267 : vector<1x4x256xbf16> to vector<4x256xbf16>
    %269 = vector.shape_cast %266 : vector<4x256xbf16> to vector<1x4x256xbf16>
    tpu.vector_store %arg6[%c2_156, %c12_157, %c0_158], %269 {strides = array<i32>} : memref<3x36x256xbf16, #tpu.memory_space<vmem>>, vector<1x4x256xbf16>,
    %c0_159 = arith.constant 0 : index
    %c0_160 = arith.constant 0 : index
    %c128_161 = arith.constant 128 : index
    %270 = vector.load %arg1[%c0_159, %c0_160, %c128_161] : memref<1x4x512xf32, #tpu.memory_space<vmem>>, vector<1x4x256xf32>
    %271 = vector.shape_cast %270 : vector<1x4x256xf32> to vector<4x256xf32>
    %c22 = arith.constant 22 : index
    %c0_162 = arith.constant 0 : index
    %272 = vector.load %arg4[%c22, %c0_162] : memref<27x256xf32, #tpu.memory_space<vmem>>, vector<1x256xf32>
    %273 = vector.shape_cast %272 : vector<1x256xf32> to vector<256xf32>
    %274 = vector.shape_cast %273 : vector<256xf32> to vector<1x256xf32>
    %275 = vector.broadcast %274 : vector<1x256xf32> to vector<4x256xf32>
    %276 = arith.mulf %271, %275 : vector<4x256xf32>
    %277 = arith.truncf %276 : vector<4x256xf32> to vector<4x256xbf16>
    %c2_163 = arith.constant 2 : index
    %c16_164 = arith.constant 16 : index
    %c0_165 = arith.constant 0 : index
    %278 = vector.load %arg6[%c2_163, %c16_164, %c0_165] : memref<3x36x256xbf16, #tpu.memory_space<vmem>>, vector<1x4x256xbf16>
    %279 = vector.shape_cast %278 : vector<1x4x256xbf16> to vector<4x256xbf16>
    %280 = vector.shape_cast %277 : vector<4x256xbf16> to vector<1x4x256xbf16>
    tpu.vector_store %arg6[%c2_163, %c16_164, %c0_165], %280 {strides = array<i32>} : memref<3x36x256xbf16, #tpu.memory_space<vmem>>, vector<1x4x256xbf16>,
    %c0_166 = arith.constant 0 : index
    %c0_167 = arith.constant 0 : index
    %c135 = arith.constant 135 : index
    %281 = vector.load %arg1[%c0_166, %c0_167, %c135] : memref<1x4x512xf32, #tpu.memory_space<vmem>>, vector<1x4x256xf32>
    %282 = vector.shape_cast %281 : vector<1x4x256xf32> to vector<4x256xf32>
    %c23_168 = arith.constant 23 : index
    %c0_169 = arith.constant 0 : index
    %283 = vector.load %arg4[%c23_168, %c0_169] : memref<27x256xf32, #tpu.memory_space<vmem>>, vector<1x256xf32>
    %284 = vector.shape_cast %283 : vector<1x256xf32> to vector<256xf32>
    %285 = vector.shape_cast %284 : vector<256xf32> to vector<1x256xf32>
    %286 = vector.broadcast %285 : vector<1x256xf32> to vector<4x256xf32>
    %287 = arith.mulf %282, %286 : vector<4x256xf32>
    %288 = arith.truncf %287 : vector<4x256xf32> to vector<4x256xbf16>
    %c2_170 = arith.constant 2 : index
    %c20_171 = arith.constant 20 : index
    %c0_172 = arith.constant 0 : index
    %289 = vector.load %arg6[%c2_170, %c20_171, %c0_172] : memref<3x36x256xbf16, #tpu.memory_space<vmem>>, vector<1x4x256xbf16>
    %290 = vector.shape_cast %289 : vector<1x4x256xbf16> to vector<4x256xbf16>
    %291 = vector.shape_cast %288 : vector<4x256xbf16> to vector<1x4x256xbf16>
    tpu.vector_store %arg6[%c2_170, %c20_171, %c0_172], %291 {strides = array<i32>} : memref<3x36x256xbf16, #tpu.memory_space<vmem>>, vector<1x4x256xbf16>,
    %c0_173 = arith.constant 0 : index
    %c0_174 = arith.constant 0 : index
    %c233 = arith.constant 233 : index
    %292 = vector.load %arg1[%c0_173, %c0_174, %c233] : memref<1x4x512xf32, #tpu.memory_space<vmem>>, vector<1x4x256xf32>
    %293 = vector.shape_cast %292 : vector<1x4x256xf32> to vector<4x256xf32>
    %c24_175 = arith.constant 24 : index
    %c0_176 = arith.constant 0 : index
    %294 = vector.load %arg4[%c24_175, %c0_176] : memref<27x256xf32, #tpu.memory_space<vmem>>, vector<1x256xf32>
    %295 = vector.shape_cast %294 : vector<1x256xf32> to vector<256xf32>
    %296 = vector.shape_cast %295 : vector<256xf32> to vector<1x256xf32>
    %297 = vector.broadcast %296 : vector<1x256xf32> to vector<4x256xf32>
    %298 = arith.mulf %293, %297 : vector<4x256xf32>
    %299 = arith.truncf %298 : vector<4x256xf32> to vector<4x256xbf16>
    %c2_177 = arith.constant 2 : index
    %c24_178 = arith.constant 24 : index
    %c0_179 = arith.constant 0 : index
    %300 = vector.load %arg6[%c2_177, %c24_178, %c0_179] : memref<3x36x256xbf16, #tpu.memory_space<vmem>>, vector<1x4x256xbf16>
    %301 = vector.shape_cast %300 : vector<1x4x256xbf16> to vector<4x256xbf16>
    %302 = vector.shape_cast %299 : vector<4x256xbf16> to vector<1x4x256xbf16>
    tpu.vector_store %arg6[%c2_177, %c24_178, %c0_179], %302 {strides = array<i32>} : memref<3x36x256xbf16, #tpu.memory_space<vmem>>, vector<1x4x256xbf16>,
    %c0_180 = arith.constant 0 : index
    %c0_181 = arith.constant 0 : index
    %c240 = arith.constant 240 : index
    %303 = vector.load %arg1[%c0_180, %c0_181, %c240] : memref<1x4x512xf32, #tpu.memory_space<vmem>>, vector<1x4x256xf32>
    %304 = vector.shape_cast %303 : vector<1x4x256xf32> to vector<4x256xf32>
    %c25 = arith.constant 25 : index
    %c0_182 = arith.constant 0 : index
    %305 = vector.load %arg4[%c25, %c0_182] : memref<27x256xf32, #tpu.memory_space<vmem>>, vector<1x256xf32>
    %306 = vector.shape_cast %305 : vector<1x256xf32> to vector<256xf32>
    %307 = vector.shape_cast %306 : vector<256xf32> to vector<1x256xf32>
    %308 = vector.broadcast %307 : vector<1x256xf32> to vector<4x256xf32>
    %309 = arith.mulf %304, %308 : vector<4x256xf32>
    %310 = arith.truncf %309 : vector<4x256xf32> to vector<4x256xbf16>
    %c2_183 = arith.constant 2 : index
    %c28_184 = arith.constant 28 : index
    %c0_185 = arith.constant 0 : index
    %311 = vector.load %arg6[%c2_183, %c28_184, %c0_185] : memref<3x36x256xbf16, #tpu.memory_space<vmem>>, vector<1x4x256xbf16>
    %312 = vector.shape_cast %311 : vector<1x4x256xbf16> to vector<4x256xbf16>
    %313 = vector.shape_cast %310 : vector<4x256xbf16> to vector<1x4x256xbf16>
    tpu.vector_store %arg6[%c2_183, %c28_184, %c0_185], %313 {strides = array<i32>} : memref<3x36x256xbf16, #tpu.memory_space<vmem>>, vector<1x4x256xbf16>,
    %c0_186 = arith.constant 0 : index
    %c0_187 = arith.constant 0 : index
    %c247 = arith.constant 247 : index
    %314 = vector.load %arg1[%c0_186, %c0_187, %c247] : memref<1x4x512xf32, #tpu.memory_space<vmem>>, vector<1x4x256xf32>
    %315 = vector.shape_cast %314 : vector<1x4x256xf32> to vector<4x256xf32>
    %c26 = arith.constant 26 : index
    %c0_188 = arith.constant 0 : index
    %316 = vector.load %arg4[%c26, %c0_188] : memref<27x256xf32, #tpu.memory_space<vmem>>, vector<1x256xf32>
    %317 = vector.shape_cast %316 : vector<1x256xf32> to vector<256xf32>
    %318 = vector.shape_cast %317 : vector<256xf32> to vector<1x256xf32>
    %319 = vector.broadcast %318 : vector<1x256xf32> to vector<4x256xf32>
    %320 = arith.mulf %315, %319 : vector<4x256xf32>
    %321 = arith.truncf %320 : vector<4x256xf32> to vector<4x256xbf16>
    %c2_189 = arith.constant 2 : index
    %c32_190 = arith.constant 32 : index
    %c0_191 = arith.constant 0 : index
    %322 = vector.load %arg6[%c2_189, %c32_190, %c0_191] : memref<3x36x256xbf16, #tpu.memory_space<vmem>>, vector<1x4x256xbf16>
    %323 = vector.shape_cast %322 : vector<1x4x256xbf16> to vector<4x256xbf16>
    %324 = vector.shape_cast %321 : vector<4x256xbf16> to vector<1x4x256xbf16>
    tpu.vector_store %arg6[%c2_189, %c32_190, %c0_191], %324 {strides = array<i32>} : memref<3x36x256xbf16, #tpu.memory_space<vmem>>, vector<1x4x256xbf16>,
    %c2_192 = arith.constant 2 : index
    %c0_193 = arith.constant 0 : index
    %c0_194 = arith.constant 0 : index
    %325 = vector.load %arg2[%c2_192, %c0_193, %c0_194] : memref<3x8x36xbf16, #tpu.memory_space<vmem>>, vector<1x8x36xbf16>
    %326 = vector.shape_cast %325 : vector<1x8x36xbf16> to vector<8x36xbf16>
    %c2_195 = arith.constant 2 : index
    %c0_196 = arith.constant 0 : index
    %c0_197 = arith.constant 0 : index
    %327 = vector.load %arg6[%c2_195, %c0_196, %c0_197] : memref<3x36x256xbf16, #tpu.memory_space<vmem>>, vector<1x36x256xbf16>
    %328 = vector.shape_cast %327 : vector<1x36x256xbf16> to vector<36x256xbf16>
    %cst_198 = arith.constant dense<0.000000e+00> : vector<8x256xf32>
    %329 = tpu.matmul %326, %328, %cst_198 {dimension_numbers = #tpu.dot_dimension_numbers<[1], [0], [0], [1], [0, 0, 1, 1], [], []>} : vector<8x36xbf16>, vector<36x256xbf16>, vector<8x256xf32> -> vector<8x256xf32>
    %c2_199 = arith.constant 2 : index
    %c0_200 = arith.constant 0 : index
    %c0_201 = arith.constant 0 : index
    %330 = vector.load %arg3[%c2_199, %c0_200, %c0_201] : memref<3x8x1xf32, #tpu.memory_space<vmem>>, vector<1x8x1xf32>
    %331 = vector.shape_cast %330 : vector<1x8x1xf32> to vector<8x1xf32>
    %332 = vector.broadcast %331 : vector<8x1xf32> to vector<8x256xf32>
    %333 = arith.addf %329, %332 : vector<8x256xf32>
    %cst_202 = arith.constant 0.000000e+00 : f32
    %334 = vector.broadcast %cst_202 : f32 to vector<8x256xf32>
    %335 = arith.maximumf %333, %334 : vector<8x256xf32>
    %c0_203 = arith.constant 0 : index
    %c16_204 = arith.constant 16 : index
    %c0_205 = arith.constant 0 : index
    %336 = vector.load %arg5[%c0_203, %c16_204, %c0_205] : memref<1x24x256xf32, #tpu.memory_space<vmem>>, vector<1x8x256xf32>
    %337 = vector.shape_cast %336 : vector<1x8x256xf32> to vector<8x256xf32>
    %338 = vector.shape_cast %335 : vector<8x256xf32> to vector<1x8x256xf32>
    tpu.vector_store %arg5[%c0_203, %c16_204, %c0_205], %338 {strides = array<i32>} : memref<1x24x256xf32, #tpu.memory_space<vmem>>, vector<1x8x256xf32>,
    return
  }
  func.func @transform_0(%arg0: i32) -> (i32, i32, i32) {
    %c0_i32 = arith.constant 0 : i32
    %c0_i32_0 = arith.constant 0 : i32
    %c0_i32_1 = arith.constant 0 : i32
    return %arg0, %c0_i32, %c0_i32_0 : i32, i32, i32
  }
  func.func @transform_1(%arg0: i32) -> (i32, i32, i32) {
    %c0_i32 = arith.constant 0 : i32
    %c0_i32_0 = arith.constant 0 : i32
    %c0_i32_1 = arith.constant 0 : i32
    %c0_i32_2 = arith.constant 0 : i32
    return %c0_i32, %c0_i32_0, %c0_i32_1 : i32, i32, i32
  }
  func.func @transform_2(%arg0: i32) -> (i32, i32, i32) {
    %c0_i32 = arith.constant 0 : i32
    %c0_i32_0 = arith.constant 0 : i32
    %c0_i32_1 = arith.constant 0 : i32
    %c0_i32_2 = arith.constant 0 : i32
    return %c0_i32, %c0_i32_0, %c0_i32_1 : i32, i32, i32
  }
  func.func @transform_3(%arg0: i32) -> (i32, i32) {
    %c0_i32 = arith.constant 0 : i32
    %c0_i32_0 = arith.constant 0 : i32
    %c0_i32_1 = arith.constant 0 : i32
    return %c0_i32, %c0_i32_0 : i32, i32
  }
  func.func @transform_4(%arg0: i32) -> (i32, i32, i32) {
    %c0_i32 = arith.constant 0 : i32
    %c0_i32_0 = arith.constant 0 : i32
    %c0_i32_1 = arith.constant 0 : i32
    return %arg0, %c0_i32, %c0_i32_0 : i32, i32, i32
  }
}

</mosaic_0001>

<llo_original>
// kernel: tpu_custom_call.1
$region0: #{tpu_custom_call.1}
  #allocation0 [shape = 'u32[]', space=smem, size = 0x4, offset = 0x4, fixed_abs, tag = 'smem constant byte address 0x4 - core index']
  #allocation1 [shape = 'u32[144,128]{1,0:T(1,128)}', space=vmem, size = 0x12000, scoped, tag = 'internal scratch']
  #allocation2 [shape = 'bf16[3,36,256]{2,1,0:T(8,128)(2,1)}', space=vmem, size = 0xf000, scoped, tag = 'scratch operand']
  %s0 = inlined_call_operand.hbm [shape: f32[2,4,512], index: 0, kind: input, shape index: {}]
  %s1 = inlined_call_operand.vmem [shape: bf16[3,8,36], index: 1, kind: input, shape index: {}]
  %s2 = inlined_call_operand.vmem [shape: f32[3,8,1], index: 2, kind: input, shape index: {}]
  %s3 = inlined_call_operand.hbm [shape: f32[27,256], index: 3, kind: input, shape index: {}]
  %s4 = inlined_call_operand.hbm [shape: f32[2,24,256], index: 4, kind: output, shape index: {}]
  %s5 = sld [smem:[#allocation0]]
  $region57: #{tpu_custom_call.1} parent=0
    _
  %s7 = ssub.s32 1, %s5
  %s8 = scalar_select 0, %s7, %s5
  $region1: #{tpu_custom_call.1} parent=0
    #allocation3 [shape = 'u8[16384]{0}', space=vmem, size = 0x4000, scoped, tag = 'input window, operand 0']
    #allocation4 [shape = 's32[2]{0}', space=sflag, size = 0x8, scoped, tag = 'scoped memory for tpu_custom_call.1']
    #allocation5 [shape = 's32[2]{0}', space=sflag, size = 0x8, scoped, tag = 'scoped memory for tpu_custom_call.1']
    #allocation6 [shape = 'u8[32768]{0}', space=vmem, size = 0x8000, scoped, tag = 'input window, operand 3, single buffered']
    #allocation7 [shape = 's32[1]{0}', space=sflag, size = 0x4, scoped, tag = 'scoped memory for tpu_custom_call.1']
    #allocation8 [shape = 'u8[49152]{0}', space=vmem, size = 0xc000, scoped, tag = 'output window, operand 0']
    %9 = vsyncpa [#allocation4], 0
    %s10 = scalar_lea.sflag [#allocation4], 1
    %11 = vsyncpa %s10, 0
    %12 = vsyncpa [#allocation7], 0
    %13 = vsyncpa [#allocation5], 0
    %s14 = scalar_lea.sflag [#allocation5], 1
    %15 = vsyncpa %s14, 0
    loop: start=0, step=1, limit=4
    $region2: #{tpu_custom_call.1} parent=1 // loop_pre_header
      _
    $region3: #{tpu_custom_call.1} parent=1 // loop_header
      %s17 = sphi 0, %s21
      %p18 = scmp.ge.s32.totalorder %s17, 4
      %s27 = sphi 0, %s29
      %s30 = sphi 0, %s27
      %s31 = sphi 0, %s30
      %s47 = sphi 0, %s31
      %s51 = sphi 0, %s51
      %s53 = sphi 0, %s51
      %s54 = sphi 0, %s53
      %s68 = sphi 0, %s54
      %s72 = sphi 0, %s72
      %s74 = sphi 0, %s72
      %s75 = sphi 0, %s74
      %s89 = sphi 0, %s75
      %s93 = sphi 0, %s93
      %s95 = sphi 0, %s93
      %s96 = sphi 0, %s95
      %s110 = sphi 0, %s96
      %s116 = sphi 0, %s118
      %s119 = sphi 0, %s116
      %s120 = sphi 0, %s119
      %s136 = sphi 0, %s120
    $region4: #{tpu_custom_call.1} parent=1 // loop_header_branch
      %20 = sbr.rel (%p18) target = $region8
    $region5: #{tpu_custom_call.1} parent=1 // loop_body
      %s22 = ssub.s32 %s17, 1
      %s23 = ssub.s32 %s17, 2
      %s24 = sadd.s32 %s17, 1
      %s25 = ssub.s32 %s17, %s24
      %p26 = scmp.eq.s32.totalorder %s25, 0
      %s28 = sadd.s32 %s27, 1
      %s29 = scalar_select %p26, %s27, %s28
      %p32 = pneg %p26
      %p33 = scmp.eq.s32.totalorder %s17, 1
      %p34 = por %p32, %p33
      %p35 = scmp.ne.s32.totalorder %s27, %s30
      %p36 = scmp.eq.s32.totalorder %s17, 0
      %p37 = por %p35, %p36
      %p38 = scmp.ne.s32.totalorder %s27, %s30
      %p39 = scmp.eq.s32.totalorder %s22, 1
      %p40 = por %p38, %p39
      %p41 = scmp.ne.s32.totalorder %s30, %s31
      %p42 = scmp.eq.s32.totalorder %s22, 0
      %p43 = por %p41, %p42
      %p44 = scmp.ne.s32.totalorder %s30, %s31
      %p45 = scmp.eq.s32.totalorder %s23, 1
      %p46 = por %p44, %p45
      %p48 = scmp.ne.s32.totalorder %s31, %s47
      %p49 = scmp.eq.s32.totalorder %s23, 0
      %p50 = por %p48, %p49
      %s52 = sadd.s32 %s51, 1
      %p55 = scmp.eq.s32.totalorder %s17, 1
      %p56 = scmp.ne.s32.totalorder %s51, %s53
      %p57 = scmp.eq.s32.totalorder %s17, 0
      %p58 = por %p56, %p57
      %p59 = scmp.ne.s32.totalorder %s51, %s53
      %p60 = scmp.eq.s32.totalorder %s22, 1
      %p61 = por %p59, %p60
      %p62 = scmp.ne.s32.totalorder %s53, %s54
      %p63 = scmp.eq.s32.totalorder %s22, 0
      %p64 = por %p62, %p63
      %p65 = scmp.ne.s32.totalorder %s53, %s54
      %p66 = scmp.eq.s32.totalorder %s23, 1
      %p67 = por %p65, %p66
      %p69 = scmp.ne.s32.totalorder %s54, %s68
      %p70 = scmp.eq.s32.totalorder %s23, 0
      %p71 = por %p69, %p70
      %s73 = sadd.s32 %s72, 1
      %p76 = scmp.eq.s32.totalorder %s17, 1
      %p77 = scmp.ne.s32.totalorder %s72, %s74
      %p78 = scmp.eq.s32.totalorder %s17, 0
      %p79 = por %p77, %p78
      %p80 = scmp.ne.s32.totalorder %s72, %s74
      %p81 = scmp.eq.s32.totalorder %s22, 1
      %p82 = por %p80, %p81
      %p83 = scmp.ne.s32.totalorder %s74, %s75
      %p84 = scmp.eq.s32.totalorder %s22, 0
      %p85 = por %p83, %p84
      %p86 = scmp.ne.s32.totalorder %s74, %s75
      %p87 = scmp.eq.s32.totalorder %s23, 1
      %p88 = por %p86, %p87
      %p90 = scmp.ne.s32.totalorder %s75, %s89
      %p91 = scmp.eq.s32.totalorder %s23, 0
      %p92 = por %p90, %p91
      %s94 = sadd.s32 %s93, 1
      %p97 = scmp.eq.s32.totalorder %s17, 1
      %p98 = scmp.ne.s32.totalorder %s93, %s95
      %p99 = scmp.eq.s32.totalorder %s17, 0
      %p100 = por %p98, %p99
      %p101 = scmp.ne.s32.totalorder %s93, %s95
      %p102 = scmp.eq.s32.totalorder %s22, 1
      %p103 = por %p101, %p102
      %p104 = scmp.ne.s32.totalorder %s95, %s96
      %p105 = scmp.eq.s32.totalorder %s22, 0
      %p106 = por %p104, %p105
      %p107 = scmp.ne.s32.totalorder %s95, %s96
      %p108 = scmp.eq.s32.totalorder %s23, 1
      %p109 = por %p107, %p108
      %p111 = scmp.ne.s32.totalorder %s96, %s110
      %p112 = scmp.eq.s32.totalorder %s23, 0
      %p113 = por %p111, %p112
      %s114 = ssub.s32 %s17, %s24
      %p115 = scmp.eq.s32.totalorder %s114, 0
      %s117 = sadd.s32 %s116, 1
      %s118 = scalar_select %p115, %s116, %s117
      %p121 = pneg %p115
      %p122 = scmp.eq.s32.totalorder %s17, 1
      %p123 = por %p121, %p122
      %p124 = scmp.ne.s32.totalorder %s116, %s119
      %p125 = scmp.eq.s32.totalorder %s17, 0
      %p126 = por %p124, %p125
      %p127 = scmp.ne.s32.totalorder %s116, %s119
      %p128 = scmp.eq.s32.totalorder %s22, 1
      %p129 = por %p127, %p128
      %p130 = scmp.ne.s32.totalorder %s119, %s120
      %p131 = scmp.eq.s32.totalorder %s22, 0
      %p132 = por %p130, %p131
      %p133 = scmp.ne.s32.totalorder %s119, %s120
      %p134 = scmp.eq.s32.totalorder %s23, 1
      %p135 = por %p133, %p134
      %p137 = scmp.ne.s32.totalorder %s120, %s136
      %p138 = scmp.eq.s32.totalorder %s23, 0
      %p139 = por %p137, %p138
      %p140 = scmp.le.s32.totalorder 1, %s17
      %p141 = scmp.lt.s32.totalorder %s17, 3
      %p142 = pnand %p140, %p141
      %p143 = pneg %p142
      // Predicated region
      $region9: #{tpu_custom_call.1} parent=5 // pred_check
        _
      $region10: #{tpu_custom_call.1} parent=5 // pred_check_branch
        %145 = sbr.rel (%p142) target = $region12
      $region11: #{tpu_custom_call.1} parent=5 // pred_region
        %s146 = ssub.s32 %s17, 1
        // Predicated region
        $region13: #{tpu_custom_call.1} parent=11 // pred_check
          %p147 = pneg %p64
        $region14: #{tpu_custom_call.1} parent=11 // pred_check_branch
          %149 = sbr.rel (%p147) target = $region16
        $region15: #{tpu_custom_call.1} parent=11 // pred_region
          _
        $region16: #{tpu_custom_call.1} parent=11 // pred_fallthru
          _
        // Predicated region
        $region17: #{tpu_custom_call.1} parent=11 // pred_check
          %p150 = pneg %p85
        $region18: #{tpu_custom_call.1} parent=11 // pred_check_branch
          %152 = sbr.rel (%p150) target = $region20
        $region19: #{tpu_custom_call.1} parent=11 // pred_region
          _
        $region20: #{tpu_custom_call.1} parent=11 // pred_fallthru
          _
        // Predicated region
        $region21: #{tpu_custom_call.1} parent=11 // pred_check
          %p153 = pneg %p106
        $region22: #{tpu_custom_call.1} parent=11 // pred_check_branch
          %155 = sbr.rel (%p153) target = $region24
        $region23: #{tpu_custom_call.1} parent=11 // pred_region
          %s157 = ssub.s32 1024, 1024
          %158 = vsyncadd [#allocation7], %s157
          %s159 = sshll.u32 [#allocation6], 4
          %s160 = int_to_ptr.vmem [resolvable:$true] %s159
          %165 = dma.hbm_to_vmem [thread:$0]  %s3, 1024, %s160, [#allocation7], 256, 256, 16
        $region24: #{tpu_custom_call.1} parent=11 // pred_fallthru
          _
      $region12: #{tpu_custom_call.1} parent=5 // pred_fallthru
        _
      %p166 = scmp.lt.s32.totalorder %s17, 2
      // Predicated region
      $region25: #{tpu_custom_call.1} parent=5 // pred_check
        %p167 = pneg %p166
      $region26: #{tpu_custom_call.1} parent=5 // pred_check_branch
        %169 = sbr.rel (%p167) target = $region28
      $region27: #{tpu_custom_call.1} parent=5 // pred_region
        // Predicated region
        $region29: #{tpu_custom_call.1} parent=27 // pred_check
          %p170 = pneg %p37
        $region30: #{tpu_custom_call.1} parent=27 // pred_check_branch
          %172 = sbr.rel (%p170) target = $region32
        $region31: #{tpu_custom_call.1} parent=27 // pred_region
          %s173 = sand.u32 %s27, 1
          %s174 = scalar_lea.sflag [#allocation4], %s173
          %s175 = sand.u32 %s27, 1
          %s176 = smul.addr %s175, 16
          %s177 = scalar_lea.vmem [#allocation3], %s176
          %s179 = ssub.s32 256, 256
          %180 = vsyncadd %s174, %s179
          %s181 = smul.addr %s17, 4
          %s182 = smul.addr %s181, 64
          %s183 = scalar_lea.hbm %s0, %s182
          %s185 = sshll.u32 %s177, 4
          %s186 = int_to_ptr.vmem [resolvable:$true] %s185
          %188 = dma.hbm_to_vmem [thread:$0]  %s183, 256, %s186, %s174
        $region32: #{tpu_custom_call.1} parent=27 // pred_fallthru
          _
      $region28: #{tpu_custom_call.1} parent=5 // pred_fallthru
        _
      %p189 = scmp.le.s32.totalorder 1, %s17
      %p190 = scmp.lt.s32.totalorder %s17, 3
      %p191 = pnand %p189, %p190
      %p192 = pneg %p191
      // Predicated region
      $region33: #{tpu_custom_call.1} parent=5 // pred_check
        _
      $region34: #{tpu_custom_call.1} parent=5 // pred_check_branch
        %194 = sbr.rel (%p191) target = $region36
      $region35: #{tpu_custom_call.1} parent=5 // pred_region
        %s195 = ssub.s32 %s17, 1
        %s196 = sand.u32 %s30, 1
        %s197 = scalar_lea.sflag [#allocation4], %s196
        %s198 = sand.u32 %s30, 1
        %s199 = smul.addr %s198, 16
        %s200 = scalar_lea.vmem [#allocation3], %s199
        // Predicated region
        $region37: #{tpu_custom_call.1} parent=35 // pred_check
          %p201 = pneg %p43
        $region38: #{tpu_custom_call.1} parent=35 // pred_check_branch
          %203 = sbr.rel (%p201) target = $region40
        $region39: #{tpu_custom_call.1} parent=35 // pred_region
          %204 = dma.done %s197, 256
        $region40: #{tpu_custom_call.1} parent=35 // pred_fallthru
          _
        // Predicated region
        $region41: #{tpu_custom_call.1} parent=35 // pred_check
          %p205 = pneg %p106
        $region42: #{tpu_custom_call.1} parent=35 // pred_check_branch
          %207 = sbr.rel (%p205) target = $region44
        $region43: #{tpu_custom_call.1} parent=35 // pred_region
          %208 = dma.done [#allocation7], 1024
        $region44: #{tpu_custom_call.1} parent=35 // pred_fallthru
          _
        %s209 = sand.u32 %s30, 1
        %s210 = scalar_lea.sflag [#allocation4], %s209
        %s211 = sand.u32 %s30, 1
        %s212 = smul.addr %s211, 16
        %s213 = scalar_lea.vmem [#allocation3], %s212
        %p214 = pneg %p43
        %p215 = pneg %p40
        %p216 = pneg %p64
        %p217 = pneg %p61
        %p218 = pneg %p85
        %p219 = pneg %p82
        %p220 = pneg %p106
        %p221 = pneg %p103
        %p222 = pneg %p132
        %p223 = pneg %p129
        %s224 = sand.u32 %s119, 1
        %s225 = scalar_lea.sflag [#allocation5], %s224
        %s226 = sand.u32 %s119, 1
        %s227 = smul.addr %s226, 48
        %s228 = scalar_lea.vmem [#allocation8], %s227
        %v230 = vld [vmem:[%s200] sm:$0xff]
        %v231 = vld [vmem:[%s200 + $0x8] sm:$0xf]
        %v232 = vld [vmem:[#allocation6] ss:$8 sm:$0x3]
        %v234 = vlaneseq
        %v235 = vshrl.u32 %v234, 7
        %v236 = vsub.s32 0, %v235
        %v237 = vrot.slane %v232, %v236
        %v238 = vlaneseq
        %v239 = vshrl.u32 %v238, 7
        %v240 = vsub.s32 1, %v239
        %v241 = vrot.slane %v232, %v240
        %v242 = vcombine.low %v237, %v241
        %243 = vrot.lane.b32.xlu0 %v242, 77
        %v244 = vpop.permute.xlu0 %243
        %v245 = vrot.slane %v244, 4
        %vm246 = vcmask 629760
        %v247 = vsel %vm246, %v245, %v244
        %v250 = vmul.f32 %v230, %v247
        %v251 = vmul.f32 %v231, %v245
        %v253 = vcombine.high %v250, %v250
        %v255 = vpack.c.bf16 %v250, %v250
        %v256 = vpack.c.bf16 %v253, %v253
        %v257 = vpack.c.bf16 %v251, %v251
        %v261 = vunpack.c.l.b16 %v255
        %v262 = vunpack.c.l.b16 %v256
        %v263 = vunpack.c.l.b16 %v257
        %v264 = vpack.c.b16 %v262, %v261
        %v265 = vpack.c.b16 %v263, %v263
        %266 = vrot.lane.b32.xlu0 %v264, 51
        %v267 = vpop.permute.xlu0 %266
        %268 = vrot.lane.b32.xlu0 %v265, 51
        %v269 = vpop.permute.xlu0 %268
        %v270 = vrot.slane %v267, 4
        %v271 = vrot.slane %v269, 4
        %vm272 = vcmask 1043456
        %v273 = vsel %vm272, %v270, %v271
        %vm274 = vcmask 416768
        %v275 = vsel %vm274, %v267, %v273
        %277 = vst [vmem:[#allocation2] sm:$0x33] %v275
        %v278 = vld [vmem:[%s200] sm:$0xff]
        %v279 = vld [vmem:[%s200 + $0x8] sm:$0xf]
        %s280 = scalar_lea.vmem [#allocation6], 1
        %v281 = vld [vmem:[%s280] ss:$8 sm:$0x3]
        %v283 = vlaneseq
        %v284 = vshrl.u32 %v283, 7
        %v285 = vsub.s32 0, %v284
        %v286 = vrot.slane %v281, %v285
        %v287 = vlaneseq
        %v288 = vshrl.u32 %v287, 7
        %v289 = vsub.s32 1, %v288
        %v290 = vrot.slane %v281, %v289
        %v291 = vcombine.low %v286, %v290
        %292 = vrot.lane.b32.xlu0 %v291, 80
        %v293 = vpop.permute.xlu0 %292
        %v294 = vrot.slane %v293, 4
        %vm295 = vcmask 654336
        %v296 = vsel %vm295, %v294, %v293
        %v299 = vmul.f32 %v278, %v296
        %v300 = vmul.f32 %v279, %v294
        %v302 = vcombine.high %v299, %v299
        %v304 = vpack.c.bf16 %v299, %v299
        %v305 = vpack.c.bf16 %v302, %v302
        %v306 = vpack.c.bf16 %v300, %v300
        %v310 = vunpack.c.l.b16 %v304
        %v311 = vunpack.c.l.b16 %v305
        %v312 = vunpack.c.l.b16 %v306
        %v313 = vpack.c.b16 %v311, %v310
        %v314 = vpack.c.b16 %v312, %v312
        %v315 = vrot.slane %v313, 6
        %v316 = vrot.slane %v314, 6
        %317 = vrot.lane.b32.xlu0 %v315, 48
        %v318 = vpop.permute.xlu0 %317
        %319 = vrot.lane.b32.xlu0 %v316, 48
        %v320 = vpop.permute.xlu0 %319
        %v321 = vrot.slane %v318, 4
        %v322 = vrot.slane %v320, 4
        %v323 = vsel %vm272, %v321, %v322
        %vm324 = vcmask 392192
        %v325 = vsel %vm324, %v318, %v323
        %327 = vst [vmem:[#allocation2] sm:$0xcc] %v325
        %v328 = vld [vmem:[%s200] sm:$0xff]
        %v329 = vld [vmem:[%s200 + $0x8] sm:$0xf]
        %s330 = scalar_lea.vmem [#allocation6], 2
        %v331 = vld [vmem:[%s330] ss:$8 sm:$0x3]
        %v333 = vlaneseq
        %v334 = vshrl.u32 %v333, 7
        %v335 = vsub.s32 0, %v334
        %v336 = vrot.slane %v331, %v335
        %v337 = vlaneseq
        %v338 = vshrl.u32 %v337, 7
        %v339 = vsub.s32 1, %v338
        %v340 = vrot.slane %v331, %v339
        %v341 = vcombine.low %v336, %v340
        %342 = vrot.lane.b32.xlu0 %v341, 83
        %v343 = vpop.permute.xlu0 %342
        %v344 = vrot.slane %v343, 4
        %vm345 = vcmask 678912
        %v346 = vsel %vm345, %v344, %v343
        %v349 = vmul.f32 %v328, %v346
        %v350 = vmul.f32 %v329, %v344
        %v352 = vcombine.high %v349, %v349
        %v354 = vpack.c.bf16 %v349, %v349
        %v355 = vpack.c.bf16 %v352, %v352
        %v356 = vpack.c.bf16 %v350, %v350
        %v360 = vunpack.c.l.b16 %v354
        %v361 = vunpack.c.l.b16 %v355
        %v362 = vunpack.c.l.b16 %v356
        %v363 = vpack.c.b16 %v361, %v360
        %v364 = vpack.c.b16 %v362, %v362
        %365 = vrot.lane.b32.xlu0 %v363, 45
        %v366 = vpop.permute.xlu0 %365
        %367 = vrot.lane.b32.xlu0 %v364, 45
        %v368 = vpop.permute.xlu0 %367
        %v369 = vrot.slane %v366, 4
        %v370 = vrot.slane %v368, 4
        %v371 = vsel %vm272, %v369, %v370
        %vm372 = vcmask 367616
        %v373 = vsel %vm372, %v366, %v371
        %375 = vst [vmem:[#allocation2 + $0x8] sm:$0x33] %v373
        %v376 = vld [vmem:[%s200] sm:$0xff]
        %v377 = vld [vmem:[%s200 + $0x8] sm:$0xf]
        %s378 = scalar_lea.vmem [#allocation6], 3
        %v379 = vld [vmem:[%s378] ss:$8 sm:$0x3]
        %v381 = vlaneseq
        %v382 = vshrl.u32 %v381, 7
        %v383 = vsub.s32 0, %v382
        %v384 = vrot.slane %v379, %v383
        %v385 = vlaneseq
        %v386 = vshrl.u32 %v385, 7
        %v387 = vsub.s32 1, %v386
        %v388 = vrot.slane %v379, %v387
        %v389 = vcombine.low %v384, %v388
        %390 = vrot.lane.b32.xlu0 %v389, 125
        %v391 = vpop.permute.xlu0 %390
        %v392 = vrot.slane %v391, 4
        %vm393 = vcmask 1022976
        %v394 = vsel %vm393, %v392, %v391
        %v397 = vmul.f32 %v376, %v394
        %v398 = vmul.f32 %v377, %v392
        %v400 = vcombine.high %v397, %v397
        %v402 = vpack.c.bf16 %v397, %v397
        %v403 = vpack.c.bf16 %v400, %v400
        %v404 = vpack.c.bf16 %v398, %v398
        %v408 = vunpack.c.l.b16 %v402
        %v409 = vunpack.c.l.b16 %v403
        %v410 = vunpack.c.l.b16 %v404
        %v411 = vpack.c.b16 %v409, %v408
        %v412 = vpack.c.b16 %v410, %v410
        %v413 = vrot.slane %v411, 6
        %v414 = vrot.slane %v412, 6
        %415 = vrot.lane.b32.xlu0 %v413, 3
        %v416 = vpop.permute.xlu0 %415
        %417 = vrot.lane.b32.xlu0 %v414, 3
        %v418 = vpop.permute.xlu0 %417
        %v419 = vrot.slane %v416, 4
        %v420 = vrot.slane %v418, 4
        %v421 = vsel %vm272, %v419, %v420
        %vm422 = vcmask 23552
        %v423 = vsel %vm422, %v416, %v421
        %425 = vst [vmem:[#allocation2 + $0x8] sm:$0xcc] %v423
        %v426 = vld [vmem:[%s200 + $0x4] sm:$0xff]
        %s427 = scalar_lea.vmem [#allocation6], 4
        %v428 = vld [vmem:[%s427] ss:$8 sm:$0x3]
        %v430 = vlaneseq
        %v431 = vshrl.u32 %v430, 7
        %v432 = vsub.s32 0, %v431
        %v433 = vrot.slane %v428, %v432
        %v434 = vlaneseq
        %v435 = vshrl.u32 %v434, 7
        %v436 = vsub.s32 1, %v435
        %v437 = vrot.slane %v428, %v436
        %v438 = vcombine.low %v433, %v437
        %v440 = vmul.f32 %v426, %v438
        %v442 = vcombine.high %v440, %v440
        %v444 = vpack.c.bf16 %v440, %v440
        %v445 = vpack.c.bf16 %v442, %v442
        %v448 = vunpack.c.l.b16 %v444
        %v449 = vunpack.c.l.b16 %v445
        %v450 = vpack.c.b16 %v449, %v448
        %452 = vst [vmem:[#allocation2 + $0x10] sm:$0x33] %v450
        %v453 = vld [vmem:[%s200 + $0x4] sm:$0xff]
        %v454 = vld [vmem:[%s200 + $0xc] sm:$0xf]
        %s455 = scalar_lea.vmem [#allocation6], 5
        %v456 = vld [vmem:[%s455] ss:$8 sm:$0x3]
        %v458 = vlaneseq
        %v459 = vshrl.u32 %v458, 7
        %v460 = vsub.s32 0, %v459
        %v461 = vrot.slane %v456, %v460
        %v462 = vlaneseq
        %v463 = vshrl.u32 %v462, 7
        %v464 = vsub.s32 1, %v463
        %v465 = vrot.slane %v456, %v464
        %v466 = vcombine.low %v461, %v465
        %467 = vrot.lane.b32.xlu0 %v466, 3
        %v468 = vpop.permute.xlu0 %467
        %v469 = vrot.slane %v468, 4
        %vm470 = vcmask 23552
        %v471 = vsel %vm470, %v469, %v468
        %v474 = vmul.f32 %v453, %v471
        %v475 = vmul.f32 %v454, %v469
        %v477 = vcombine.high %v474, %v474
        %v479 = vpack.c.bf16 %v474, %v474
        %v480 = vpack.c.bf16 %v477, %v477
        %v481 = vpack.c.bf16 %v475, %v475
        %v485 = vunpack.c.l.b16 %v479
        %v486 = vunpack.c.l.b16 %v480
        %v487 = vunpack.c.l.b16 %v481
        %v488 = vpack.c.b16 %v486, %v485
        %v489 = vpack.c.b16 %v487, %v487
        %v490 = vrot.slane %v488, 6
        %v491 = vrot.slane %v489, 6
        %492 = vrot.lane.b32.xlu0 %v490, 125
        %v493 = vpop.permute.xlu0 %492
        %494 = vrot.lane.b32.xlu0 %v491, 125
        %v495 = vpop.permute.xlu0 %494
        %v496 = vrot.slane %v493, 4
        %v497 = vrot.slane %v495, 4
        %v498 = vsel %vm272, %v496, %v497
        %vm499 = vcmask 1022976
        %v500 = vsel %vm499, %v493, %v498
        %502 = vst [vmem:[#allocation2 + $0x10] sm:$0xcc] %v500
        %v503 = vld [vmem:[%s200 + $0x4] sm:$0xff]
        %v504 = vld [vmem:[%s200 + $0xc] sm:$0xf]
        %s505 = scalar_lea.vmem [#allocation6], 6
        %v506 = vld [vmem:[%s505] ss:$8 sm:$0x3]
        %v508 = vlaneseq
        %v509 = vshrl.u32 %v508, 7
        %v510 = vsub.s32 0, %v509
        %v511 = vrot.slane %v506, %v510
        %v512 = vlaneseq
        %v513 = vshrl.u32 %v512, 7
        %v514 = vsub.s32 1, %v513
        %v515 = vrot.slane %v506, %v514
        %v516 = vcombine.low %v511, %v515
        %517 = vrot.lane.b32.xlu0 %v516, 45
        %v518 = vpop.permute.xlu0 %517
        %v519 = vrot.slane %v518, 4
        %vm520 = vcmask 367616
        %v521 = vsel %vm520, %v519, %v518
        %v524 = vmul.f32 %v503, %v521
        %v525 = vmul.f32 %v504, %v519
        %v527 = vcombine.high %v524, %v524
        %v529 = vpack.c.bf16 %v524, %v524
        %v530 = vpack.c.bf16 %v527, %v527
        %v531 = vpack.c.bf16 %v525, %v525
        %v535 = vunpack.c.l.b16 %v529
        %v536 = vunpack.c.l.b16 %v530
        %v537 = vunpack.c.l.b16 %v531
        %v538 = vpack.c.b16 %v536, %v535
        %v539 = vpack.c.b16 %v537, %v537
        %540 = vrot.lane.b32.xlu0 %v538, 83
        %v541 = vpop.permute.xlu0 %540
        %542 = vrot.lane.b32.xlu0 %v539, 83
        %v543 = vpop.permute.xlu0 %542
        %v544 = vrot.slane %v541, 4
        %v545 = vrot.slane %v543, 4
        %v546 = vsel %vm272, %v544, %v545
        %vm547 = vcmask 678912
        %v548 = vsel %vm547, %v541, %v546
        %550 = vst [vmem:[#allocation2 + $0x18] sm:$0x33] %v548
        %v551 = vld [vmem:[%s200 + $0x4] sm:$0xff]
        %v552 = vld [vmem:[%s200 + $0xc] sm:$0xf]
        %s553 = scalar_lea.vmem [#allocation6], 7
        %v554 = vld [vmem:[%s553] ss:$8 sm:$0x3]
        %v556 = vlaneseq
        %v557 = vshrl.u32 %v556, 7
        %v558 = vsub.s32 0, %v557
        %v559 = vrot.slane %v554, %v558
        %v560 = vlaneseq
        %v561 = vshrl.u32 %v560, 7
        %v562 = vsub.s32 1, %v561
        %v563 = vrot.slane %v554, %v562
        %v564 = vcombine.low %v559, %v563
        %565 = vrot.lane.b32.xlu0 %v564, 48
        %v566 = vpop.permute.xlu0 %565
        %v567 = vrot.slane %v566, 4
        %vm568 = vcmask 392192
        %v569 = vsel %vm568, %v567, %v566
        %v572 = vmul.f32 %v551, %v569
        %v573 = vmul.f32 %v552, %v567
        %v575 = vcombine.high %v572, %v572
        %v577 = vpack.c.bf16 %v572, %v572
        %v578 = vpack.c.bf16 %v575, %v575
        %v579 = vpack.c.bf16 %v573, %v573
        %v583 = vunpack.c.l.b16 %v577
        %v584 = vunpack.c.l.b16 %v578
        %v585 = vunpack.c.l.b16 %v579
        %v586 = vpack.c.b16 %v584, %v583
        %v587 = vpack.c.b16 %v585, %v585
        %v588 = vrot.slane %v586, 6
        %v589 = vrot.slane %v587, 6
        %590 = vrot.lane.b32.xlu0 %v588, 80
        %v591 = vpop.permute.xlu0 %590
        %592 = vrot.lane.b32.xlu0 %v589, 80
        %v593 = vpop.permute.xlu0 %592
        %v594 = vrot.slane %v591, 4
        %v595 = vrot.slane %v593, 4
        %v596 = vsel %vm272, %v594, %v595
        %vm597 = vcmask 654336
        %v598 = vsel %vm597, %v591, %v596
        %600 = vst [vmem:[#allocation2 + $0x18] sm:$0xcc] %v598
        %v601 = vld [vmem:[%s200 + $0x4] sm:$0xff]
        %v602 = vld [vmem:[%s200 + $0xc] sm:$0xf]
        %s603 = scalar_lea.vmem [#allocation6], 16
        %v604 = vld [vmem:[%s603] ss:$8 sm:$0x3]
        %v606 = vlaneseq
        %v607 = vshrl.u32 %v606, 7
        %v608 = vsub.s32 0, %v607
        %v609 = vrot.slane %v604, %v608
        %v610 = vlaneseq
        %v611 = vshrl.u32 %v610, 7
        %v612 = vsub.s32 1, %v611
        %v613 = vrot.slane %v604, %v612
        %v614 = vcombine.low %v609, %v613
        %615 = vrot.lane.b32.xlu0 %v614, 51
        %v616 = vpop.permute.xlu0 %615
        %v617 = vrot.slane %v616, 4
        %vm618 = vcmask 416768
        %v619 = vsel %vm618, %v617, %v616
        %v622 = vmul.f32 %v601, %v619
        %v623 = vmul.f32 %v602, %v617
        %v625 = vcombine.high %v622, %v622
        %v627 = vpack.c.bf16 %v622, %v622
        %v628 = vpack.c.bf16 %v625, %v625
        %v629 = vpack.c.bf16 %v623, %v623
        %v633 = vunpack.c.l.b16 %v627
        %v634 = vunpack.c.l.b16 %v628
        %v635 = vunpack.c.l.b16 %v629
        %v636 = vpack.c.b16 %v634, %v633
        %v637 = vpack.c.b16 %v635, %v635
        %638 = vrot.lane.b32.xlu0 %v636, 77
        %v639 = vpop.permute.xlu0 %638
        %640 = vrot.lane.b32.xlu0 %v637, 77
        %v641 = vpop.permute.xlu0 %640
        %v642 = vrot.slane %v639, 4
        %v643 = vrot.slane %v641, 4
        %v644 = vsel %vm272, %v642, %v643
        %vm645 = vcmask 629760
        %v646 = vsel %vm645, %v639, %v644
        %648 = vst [vmem:[#allocation2 + $0x20] sm:$0x33] %v646
        %v649 = vld [vmem:[%s1] sm:$0xf]
        %v650 = vld [vmem:[#allocation2] sm:$0xff]
        %v651 = vld [vmem:[#allocation2 + $0x8] sm:$0xff]
        %v652 = vld [vmem:[#allocation2 + $0x10] sm:$0xff]
        %v653 = vld [vmem:[#allocation2 + $0x18] sm:$0xff]
        %v654 = vld [vmem:[#allocation2 + $0x20] sm:$0x33]
        %v655 = vld [vmem:[%s2] sm:$0xff]
        %657 = vset.pattern.permute.xlu0 0
        %658 = vperm.xlu0 %657, %v655
        %v659 = vpop.permute.xlu0 %658
        %v666 = vunpack.c.l.b16 %v650
        %v667 = vunpack.c.h.b16 %v650
        %v668 = vunpack.c.l.b16 %v651
        %v669 = vunpack.c.h.b16 %v651
        %v670 = vunpack.c.l.b16 %v652
        %v671 = vunpack.c.h.b16 %v652
        %v672 = vunpack.c.l.b16 %v653
        %v673 = vunpack.c.h.b16 %v653
        %v674 = vunpack.c.l.b16 %v654
        %v675 = vunpack.c.h.b16 %v654
        %v676 = vpack.c.b16 %v668, %v666
        %v677 = vpack.c.b16 %v669, %v667
        %v678 = vpack.c.b16 %v672, %v670
        %v679 = vpack.c.b16 %v673, %v671
        %v680 = vpack.c.b16 %v674, %v674
        %v681 = vpack.c.b16 %v675, %v675
        %vm686 = vcmask 293888
        %v688 = vsel %vm686, %v649, 0
        %vm690 = vcmask 1041408
        %v692 = vsel %vm690, %v680, 0
        %v695 = vsel %vm690, %v681, 0
        %697 = vmatprep.subr.bf16.mxu0 0
        %698 = vmatpush1.bf16.msra.mxu0 0
        %699 = vmatprep.subr.bf16.mxu0 0
        %700 = vmatpush1.bf16.msra.mxu0 0
        %701 = vmatprep.subr.bf16.mxu0 0
        %702 = vmatpush1.bf16.msra.mxu0 0
        %703 = vmatprep.subr.bf16.mxu0 0
        %704 = vmatpush1.bf16.msra.mxu0 0
        %705 = vmatprep.subr.bf16.mxu0 0
        %706 = vmatpush1.bf16.msra.mxu0 0
        %707 = vmatprep.subr.bf16.mxu0 %v695
        %708 = vmatpush1.bf16.msra.mxu0 %v692
        %709 = vmatprep.subr.bf16.mxu0 %v679
        %710 = vmatpush1.bf16.msra.mxu0 %v678
        %711 = vmatprep.subr.bf16.mxu0 %v677
        %712 = vmatpush1.bf16.msra.mxu0 %v676
        %713 = vmatprep.subr.bf16.mxu0 0
        %714 = vmatpush2.bf16.msra.mxu0 0
        %715 = vmatprep.subr.bf16.mxu0 0
        %716 = vmatpush2.bf16.msra.mxu0 0
        %717 = vmatprep.subr.bf16.mxu0 0
        %718 = vmatpush2.bf16.msra.mxu0 0
        %719 = vmatprep.subr.bf16.mxu0 0
        %720 = vmatpush2.bf16.msra.mxu0 0
        %721 = vmatprep.subr.bf16.mxu0 0
        %722 = vmatpush2.bf16.msra.mxu0 0
        %723 = vmatprep.subr.bf16.mxu0 0
        %724 = vmatpush2.bf16.msra.mxu0 0
        %725 = vmatprep.subr.bf16.mxu0 0
        %726 = vmatpush2.bf16.msra.mxu0 0
        %727 = vmatprep.subr.bf16.mxu0 0
        %728 = vmatpush2.bf16.msra.mxu0 0
        %729 = vmatprep.mubr.bf16.mxu0 0
        %730 = vmatmul.mubr.bf16.gmra.mxu0 %v688
        %v731 = vpop.f32.mrf.mxu0
        %v732 = vadd.f32 %v659, %v731
        %v733 = vpop.f32.mrf.mxu0
        %v734 = vadd.f32 %v659, %v733
        %v735 = vpop.f32.mrf.mxu0
        %v736 = vpop.f32.mrf.mxu0
        %737 = vdwg.mxu0
        %v738 = vmax.f32 %v732, 0.0
        %v739 = vmax.f32 %v734, 0.0
        %740 = vst [vmem:[%s228] sm:$0xff] %v738
        %741 = vst [vmem:[%s228 + $0x8] sm:$0xff] %v739
        %v742 = vld [vmem:[%s200] sm:$0xff]
        %v743 = vld [vmem:[%s200 + $0x8] sm:$0xf]
        %s744 = scalar_lea.vmem [#allocation6], 17
        %v745 = vld [vmem:[%s744] ss:$8 sm:$0x3]
        %v747 = vlaneseq
        %v748 = vshrl.u32 %v747, 7
        %v749 = vsub.s32 0, %v748
        %v750 = vrot.slane %v745, %v749
        %v751 = vlaneseq
        %v752 = vshrl.u32 %v751, 7
        %v753 = vsub.s32 1, %v752
        %v754 = vrot.slane %v745, %v753
        %v755 = vcombine.low %v750, %v754
        %756 = vrot.lane.b32.xlu0 %v755, 43
        %v757 = vpop.permute.xlu0 %756
        %v758 = vrot.slane %v757, 4
        %vm759 = vcmask 351232
        %v760 = vsel %vm759, %v758, %v757
        %v763 = vmul.f32 %v742, %v760
        %v764 = vmul.f32 %v743, %v758
        %v766 = vcombine.high %v763, %v763
        %v768 = vpack.c.bf16 %v763, %v763
        %v769 = vpack.c.bf16 %v766, %v766
        %v770 = vpack.c.bf16 %v764, %v764
        %v774 = vunpack.c.l.b16 %v768
        %v775 = vunpack.c.l.b16 %v769
        %v776 = vunpack.c.l.b16 %v770
        %v777 = vpack.c.b16 %v775, %v774
        %v778 = vpack.c.b16 %v776, %v776
        %779 = vrot.lane.b32.xlu0 %v777, 85
        %v780 = vpop.permute.xlu0 %779
        %781 = vrot.lane.b32.xlu0 %v778, 85
        %v782 = vpop.permute.xlu0 %781
        %v783 = vrot.slane %v780, 4
        %v784 = vrot.slane %v782, 4
        %v785 = vsel %vm272, %v783, %v784
        %vm786 = vcmask 695296
        %v787 = vsel %vm786, %v780, %v785
        %s789 = scalar_lea.vmem [#allocation2], 40
        %790 = vst [vmem:[%s789] sm:$0x33] %v787
        %v791 = vld [vmem:[%s200] sm:$0xff]
        %v792 = vld [vmem:[%s200 + $0x8] sm:$0xf]
        %s793 = scalar_lea.vmem [#allocation6], 18
        %v794 = vld [vmem:[%s793] ss:$8 sm:$0x3]
        %v796 = vlaneseq
        %v797 = vshrl.u32 %v796, 7
        %v798 = vsub.s32 0, %v797
        %v799 = vrot.slane %v794, %v798
        %v800 = vlaneseq
        %v801 = vshrl.u32 %v800, 7
        %v802 = vsub.s32 1, %v801
        %v803 = vrot.slane %v794, %v802
        %v804 = vcombine.low %v799, %v803
        %805 = vrot.lane.b32.xlu0 %v804, 48
        %v806 = vpop.permute.xlu0 %805
        %v807 = vrot.slane %v806, 4
        %v808 = vsel %vm568, %v807, %v806
        %v811 = vmul.f32 %v791, %v808
        %v812 = vmul.f32 %v792, %v807
        %v814 = vcombine.high %v811, %v811
        %v816 = vpack.c.bf16 %v811, %v811
        %v817 = vpack.c.bf16 %v814, %v814
        %v818 = vpack.c.bf16 %v812, %v812
        %v822 = vunpack.c.l.b16 %v816
        %v823 = vunpack.c.l.b16 %v817
        %v824 = vunpack.c.l.b16 %v818
        %v825 = vpack.c.b16 %v823, %v822
        %v826 = vpack.c.b16 %v824, %v824
        %v827 = vrot.slane %v825, 6
        %v828 = vrot.slane %v826, 6
        %829 = vrot.lane.b32.xlu0 %v827, 80
        %v830 = vpop.permute.xlu0 %829
        %831 = vrot.lane.b32.xlu0 %v828, 80
        %v832 = vpop.permute.xlu0 %831
        %v833 = vrot.slane %v830, 4
        %v834 = vrot.slane %v832, 4
        %v835 = vsel %vm272, %v833, %v834
        %v836 = vsel %vm597, %v830, %v835
        %838 = vst [vmem:[%s789] sm:$0xcc] %v836
        %v839 = vld [vmem:[%s200] sm:$0xff]
        %v840 = vld [vmem:[%s200 + $0x8] sm:$0xf]
        %s841 = scalar_lea.vmem [#allocation6], 19
        %v842 = vld [vmem:[%s841] ss:$8 sm:$0x3]
        %v844 = vlaneseq
        %v845 = vshrl.u32 %v844, 7
        %v846 = vsub.s32 0, %v845
        %v847 = vrot.slane %v842, %v846
        %v848 = vlaneseq
        %v849 = vshrl.u32 %v848, 7
        %v850 = vsub.s32 1, %v849
        %v851 = vrot.slane %v842, %v850
        %v852 = vcombine.low %v847, %v851
        %853 = vrot.lane.b32.xlu0 %v852, 53
        %v854 = vpop.permute.xlu0 %853
        %v855 = vrot.slane %v854, 4
        %vm856 = vcmask 433152
        %v857 = vsel %vm856, %v855, %v854
        %v860 = vmul.f32 %v839, %v857
        %v861 = vmul.f32 %v840, %v855
        %v863 = vcombine.high %v860, %v860
        %v865 = vpack.c.bf16 %v860, %v860
        %v866 = vpack.c.bf16 %v863, %v863
        %v867 = vpack.c.bf16 %v861, %v861
        %v871 = vunpack.c.l.b16 %v865
        %v872 = vunpack.c.l.b16 %v866
        %v873 = vunpack.c.l.b16 %v867
        %v874 = vpack.c.b16 %v872, %v871
        %v875 = vpack.c.b16 %v873, %v873
        %876 = vrot.lane.b32.xlu0 %v874, 75
        %v877 = vpop.permute.xlu0 %876
        %878 = vrot.lane.b32.xlu0 %v875, 75
        %v879 = vpop.permute.xlu0 %878
        %v880 = vrot.slane %v877, 4
        %v881 = vrot.slane %v879, 4
        %v882 = vsel %vm272, %v880, %v881
        %vm883 = vcmask 613376
        %v884 = vsel %vm883, %v877, %v882
        %886 = vst [vmem:[%s789 + $0x8] sm:$0x33] %v884
        %v887 = vld [vmem:[%s200] sm:$0xff]
        %v888 = vld [vmem:[%s200 + $0x8] sm:$0xf]
        %s889 = scalar_lea.vmem [#allocation6], 20
        %v890 = vld [vmem:[%s889] ss:$8 sm:$0x3]
        %v892 = vlaneseq
        %v893 = vshrl.u32 %v892, 7
        %v894 = vsub.s32 0, %v893
        %v895 = vrot.slane %v890, %v894
        %v896 = vlaneseq
        %v897 = vshrl.u32 %v896, 7
        %v898 = vsub.s32 1, %v897
        %v899 = vrot.slane %v890, %v898
        %v900 = vcombine.low %v895, %v899
        %901 = vrot.lane.b32.xlu0 %v900, 123
        %v902 = vpop.permute.xlu0 %901
        %v903 = vrot.slane %v902, 4
        %vm904 = vcmask 1006592
        %v905 = vsel %vm904, %v903, %v902
        %v908 = vmul.f32 %v887, %v905
        %v909 = vmul.f32 %v888, %v903
        %v911 = vcombine.high %v908, %v908
        %v913 = vpack.c.bf16 %v908, %v908
        %v914 = vpack.c.bf16 %v911, %v911
        %v915 = vpack.c.bf16 %v909, %v909
        %v919 = vunpack.c.l.b16 %v913
        %v920 = vunpack.c.l.b16 %v914
        %v921 = vunpack.c.l.b16 %v915
        %v922 = vpack.c.b16 %v920, %v919
        %v923 = vpack.c.b16 %v921, %v921
        %v924 = vrot.slane %v922, 6
        %v925 = vrot.slane %v923, 6
        %926 = vrot.lane.b32.xlu0 %v924, 5
        %v927 = vpop.permute.xlu0 %926
        %928 = vrot.lane.b32.xlu0 %v925, 5
        %v929 = vpop.permute.xlu0 %928
        %v930 = vrot.slane %v927, 4
        %v931 = vrot.slane %v929, 4
        %v932 = vsel %vm272, %v930, %v931
        %vm933 = vcmask 39936
        %v934 = vsel %vm933, %v927, %v932
        %936 = vst [vmem:[%s789 + $0x8] sm:$0xcc] %v934
        %v937 = vld [vmem:[%s200 + $0x4] sm:$0xff]
        %s938 = scalar_lea.vmem [#allocation6], 21
        %v939 = vld [vmem:[%s938] ss:$8 sm:$0x3]
        %v941 = vlaneseq
        %v942 = vshrl.u32 %v941, 7
        %v943 = vsub.s32 0, %v942
        %v944 = vrot.slane %v939, %v943
        %v945 = vlaneseq
        %v946 = vshrl.u32 %v945, 7
        %v947 = vsub.s32 1, %v946
        %v948 = vrot.slane %v939, %v947
        %v949 = vcombine.low %v944, %v948
        %v951 = vmul.f32 %v937, %v949
        %v953 = vcombine.high %v951, %v951
        %v955 = vpack.c.bf16 %v951, %v951
        %v956 = vpack.c.bf16 %v953, %v953
        %v959 = vunpack.c.l.b16 %v955
        %v960 = vunpack.c.l.b16 %v956
        %v961 = vpack.c.b16 %v960, %v959
        %963 = vst [vmem:[%s789 + $0x10] sm:$0x33] %v961
        %v964 = vld [vmem:[%s200 + $0x4] sm:$0xff]
        %v965 = vld [vmem:[%s200 + $0xc] sm:$0xf]
        %s966 = scalar_lea.vmem [#allocation6], 22
        %v967 = vld [vmem:[%s966] ss:$8 sm:$0x3]
        %v969 = vlaneseq
        %v970 = vshrl.u32 %v969, 7
        %v971 = vsub.s32 0, %v970
        %v972 = vrot.slane %v967, %v971
        %v973 = vlaneseq
        %v974 = vshrl.u32 %v973, 7
        %v975 = vsub.s32 1, %v974
        %v976 = vrot.slane %v967, %v975
        %v977 = vcombine.low %v972, %v976
        %978 = vrot.lane.b32.xlu0 %v977, 5
        %v979 = vpop.permute.xlu0 %978
        %v980 = vrot.slane %v979, 4
        %vm981 = vcmask 39936
        %v982 = vsel %vm981, %v980, %v979
        %v985 = vmul.f32 %v964, %v982
        %v986 = vmul.f32 %v965, %v980
        %v988 = vcombine.high %v985, %v985
        %v990 = vpack.c.bf16 %v985, %v985
        %v991 = vpack.c.bf16 %v988, %v988
        %v992 = vpack.c.bf16 %v986, %v986
        %v996 = vunpack.c.l.b16 %v990
        %v997 = vunpack.c.l.b16 %v991
        %v998 = vunpack.c.l.b16 %v992
        %v999 = vpack.c.b16 %v997, %v996
        %v1000 = vpack.c.b16 %v998, %v998
        %v1001 = vrot.slane %v999, 6
        %v1002 = vrot.slane %v1000, 6
        %1003 = vrot.lane.b32.xlu0 %v1001, 123
        %v1004 = vpop.permute.xlu0 %1003
        %1005 = vrot.lane.b32.xlu0 %v1002, 123
        %v1006 = vpop.permute.xlu0 %1005
        %v1007 = vrot.slane %v1004, 4
        %v1008 = vrot.slane %v1006, 4
        %v1009 = vsel %vm272, %v1007, %v1008
        %vm1010 = vcmask 1006592
        %v1011 = vsel %vm1010, %v1004, %v1009
        %1013 = vst [vmem:[%s789 + $0x10] sm:$0xcc] %v1011
        %v1014 = vld [vmem:[%s200 + $0x4] sm:$0xff]
        %v1015 = vld [vmem:[%s200 + $0xc] sm:$0xf]
        %s1016 = scalar_lea.vmem [#allocation6], 23
        %v1017 = vld [vmem:[%s1016] ss:$8 sm:$0x3]
        %v1019 = vlaneseq
        %v1020 = vshrl.u32 %v1019, 7
        %v1021 = vsub.s32 0, %v1020
        %v1022 = vrot.slane %v1017, %v1021
        %v1023 = vlaneseq
        %v1024 = vshrl.u32 %v1023, 7
        %v1025 = vsub.s32 1, %v1024
        %v1026 = vrot.slane %v1017, %v1025
        %v1027 = vcombine.low %v1022, %v1026
        %1028 = vrot.lane.b32.xlu0 %v1027, 75
        %v1029 = vpop.permute.xlu0 %1028
        %v1030 = vrot.slane %v1029, 4
        %vm1031 = vcmask 613376
        %v1032 = vsel %vm1031, %v1030, %v1029
        %v1035 = vmul.f32 %v1014, %v1032
        %v1036 = vmul.f32 %v1015, %v1030
        %v1038 = vcombine.high %v1035, %v1035
        %v1040 = vpack.c.bf16 %v1035, %v1035
        %v1041 = vpack.c.bf16 %v1038, %v1038
        %v1042 = vpack.c.bf16 %v1036, %v1036
        %v1046 = vunpack.c.l.b16 %v1040
        %v1047 = vunpack.c.l.b16 %v1041
        %v1048 = vunpack.c.l.b16 %v1042
        %v1049 = vpack.c.b16 %v1047, %v1046
        %v1050 = vpack.c.b16 %v1048, %v1048
        %1051 = vrot.lane.b32.xlu0 %v1049, 53
        %v1052 = vpop.permute.xlu0 %1051
        %1053 = vrot.lane.b32.xlu0 %v1050, 53
        %v1054 = vpop.permute.xlu0 %1053
        %v1055 = vrot.slane %v1052, 4
        %v1056 = vrot.slane %v1054, 4
        %v1057 = vsel %vm272, %v1055, %v1056
        %vm1058 = vcmask 433152
        %v1059 = vsel %vm1058, %v1052, %v1057
        %1061 = vst [vmem:[%s789 + $0x18] sm:$0x33] %v1059
        %v1062 = vld [vmem:[%s200 + $0x4] sm:$0xff]
        %v1063 = vld [vmem:[%s200 + $0xc] sm:$0xf]
        %s1064 = scalar_lea.vmem [#allocation6], 32
        %v1065 = vld [vmem:[%s1064] ss:$8 sm:$0x3]
        %v1067 = vlaneseq
        %v1068 = vshrl.u32 %v1067, 7
        %v1069 = vsub.s32 0, %v1068
        %v1070 = vrot.slane %v1065, %v1069
        %v1071 = vlaneseq
        %v1072 = vshrl.u32 %v1071, 7
        %v1073 = vsub.s32 1, %v1072
        %v1074 = vrot.slane %v1065, %v1073
        %v1075 = vcombine.low %v1070, %v1074
        %1076 = vrot.lane.b32.xlu0 %v1075, 80
        %v1077 = vpop.permute.xlu0 %1076
        %v1078 = vrot.slane %v1077, 4
        %v1079 = vsel %vm295, %v1078, %v1077
        %v1082 = vmul.f32 %v1062, %v1079
        %v1083 = vmul.f32 %v1063, %v1078
        %v1085 = vcombine.high %v1082, %v1082
        %v1087 = vpack.c.bf16 %v1082, %v1082
        %v1088 = vpack.c.bf16 %v1085, %v1085
        %v1089 = vpack.c.bf16 %v1083, %v1083
        %v1093 = vunpack.c.l.b16 %v1087
        %v1094 = vunpack.c.l.b16 %v1088
        %v1095 = vunpack.c.l.b16 %v1089
        %v1096 = vpack.c.b16 %v1094, %v1093
        %v1097 = vpack.c.b16 %v1095, %v1095
        %v1098 = vrot.slane %v1096, 6
        %v1099 = vrot.slane %v1097, 6
        %1100 = vrot.lane.b32.xlu0 %v1098, 48
        %v1101 = vpop.permute.xlu0 %1100
        %1102 = vrot.lane.b32.xlu0 %v1099, 48
        %v1103 = vpop.permute.xlu0 %1102
        %v1104 = vrot.slane %v1101, 4
        %v1105 = vrot.slane %v1103, 4
        %v1106 = vsel %vm272, %v1104, %v1105
        %v1107 = vsel %vm324, %v1101, %v1106
        %1109 = vst [vmem:[%s789 + $0x18] sm:$0xcc] %v1107
        %v1110 = vld [vmem:[%s200 + $0x4] sm:$0xff]
        %v1111 = vld [vmem:[%s200 + $0xc] sm:$0xf]
        %s1112 = scalar_lea.vmem [#allocation6], 33
        %v1113 = vld [vmem:[%s1112] ss:$8 sm:$0x3]
        %v1115 = vlaneseq
        %v1116 = vshrl.u32 %v1115, 7
        %v1117 = vsub.s32 0, %v1116
        %v1118 = vrot.slane %v1113, %v1117
        %v1119 = vlaneseq
        %v1120 = vshrl.u32 %v1119, 7
        %v1121 = vsub.s32 1, %v1120
        %v1122 = vrot.slane %v1113, %v1121
        %v1123 = vcombine.low %v1118, %v1122
        %1124 = vrot.lane.b32.xlu0 %v1123, 85
        %v1125 = vpop.permute.xlu0 %1124
        %v1126 = vrot.slane %v1125, 4
        %vm1127 = vcmask 695296
        %v1128 = vsel %vm1127, %v1126, %v1125
        %v1131 = vmul.f32 %v1110, %v1128
        %v1132 = vmul.f32 %v1111, %v1126
        %v1134 = vcombine.high %v1131, %v1131
        %v1136 = vpack.c.bf16 %v1131, %v1131
        %v1137 = vpack.c.bf16 %v1134, %v1134
        %v1138 = vpack.c.bf16 %v1132, %v1132
        %v1142 = vunpack.c.l.b16 %v1136
        %v1143 = vunpack.c.l.b16 %v1137
        %v1144 = vunpack.c.l.b16 %v1138
        %v1145 = vpack.c.b16 %v1143, %v1142
        %v1146 = vpack.c.b16 %v1144, %v1144
        %1147 = vrot.lane.b32.xlu0 %v1145, 43
        %v1148 = vpop.permute.xlu0 %1147
        %1149 = vrot.lane.b32.xlu0 %v1146, 43
        %v1150 = vpop.permute.xlu0 %1149
        %v1151 = vrot.slane %v1148, 4
        %v1152 = vrot.slane %v1150, 4
        %v1153 = vsel %vm272, %v1151, %v1152
        %vm1154 = vcmask 351232
        %v1155 = vsel %vm1154, %v1148, %v1153
        %1157 = vst [vmem:[%s789 + $0x20] sm:$0x33] %v1155
        %s1158 = scalar_lea.vmem %s1, 4
        %v1159 = vld [vmem:[%s1158] sm:$0xf]
        %v1160 = vld [vmem:[%s789] sm:$0xff]
        %v1161 = vld [vmem:[%s789 + $0x8] sm:$0xff]
        %v1162 = vld [vmem:[%s789 + $0x10] sm:$0xff]
        %v1163 = vld [vmem:[%s789 + $0x18] sm:$0xff]
        %v1164 = vld [vmem:[%s789 + $0x20] sm:$0x33]
        %s1165 = scalar_lea.vmem %s2, 8
        %v1166 = vld [vmem:[%s1165] sm:$0xff]
        %1168 = vset.pattern.permute.xlu0 0
        %1169 = vperm.xlu0 %1168, %v1166
        %v1170 = vpop.permute.xlu0 %1169
        %v1177 = vunpack.c.l.b16 %v1160
        %v1178 = vunpack.c.h.b16 %v1160
        %v1179 = vunpack.c.l.b16 %v1161
        %v1180 = vunpack.c.h.b16 %v1161
        %v1181 = vunpack.c.l.b16 %v1162
        %v1182 = vunpack.c.h.b16 %v1162
        %v1183 = vunpack.c.l.b16 %v1163
        %v1184 = vunpack.c.h.b16 %v1163
        %v1185 = vunpack.c.l.b16 %v1164
        %v1186 = vunpack.c.h.b16 %v1164
        %v1187 = vpack.c.b16 %v1179, %v1177
        %v1188 = vpack.c.b16 %v1180, %v1178
        %v1189 = vpack.c.b16 %v1183, %v1181
        %v1190 = vpack.c.b16 %v1184, %v1182
        %v1191 = vpack.c.b16 %v1185, %v1185
        %v1192 = vpack.c.b16 %v1186, %v1186
        %v1198 = vsel %vm686, %v1159, 0
        %v1201 = vsel %vm690, %v1191, 0
        %v1204 = vsel %vm690, %v1192, 0
        %1206 = vmatprep.subr.bf16.mxu0 0
        %1207 = vmatpush1.bf16.msra.mxu0 0
        %1208 = vmatprep.subr.bf16.mxu0 0
        %1209 = vmatpush1.bf16.msra.mxu0 0
        %1210 = vmatprep.subr.bf16.mxu0 0
        %1211 = vmatpush1.bf16.msra.mxu0 0
        %1212 = vmatprep.subr.bf16.mxu0 0
        %1213 = vmatpush1.bf16.msra.mxu0 0
        %1214 = vmatprep.subr.bf16.mxu0 0
        %1215 = vmatpush1.bf16.msra.mxu0 0
        %1216 = vmatprep.subr.bf16.mxu0 %v1204
        %1217 = vmatpush1.bf16.msra.mxu0 %v1201
        %1218 = vmatprep.subr.bf16.mxu0 %v1190
        %1219 = vmatpush1.bf16.msra.mxu0 %v1189
        %1220 = vmatprep.subr.bf16.mxu0 %v1188
        %1221 = vmatpush1.bf16.msra.mxu0 %v1187
        %1222 = vmatprep.subr.bf16.mxu0 0
        %1223 = vmatpush2.bf16.msra.mxu0 0
        %1224 = vmatprep.subr.bf16.mxu0 0
        %1225 = vmatpush2.bf16.msra.mxu0 0
        %1226 = vmatprep.subr.bf16.mxu0 0
        %1227 = vmatpush2.bf16.msra.mxu0 0
        %1228 = vmatprep.subr.bf16.mxu0 0
        %1229 = vmatpush2.bf16.msra.mxu0 0
        %1230 = vmatprep.subr.bf16.mxu0 0
        %1231 = vmatpush2.bf16.msra.mxu0 0
        %1232 = vmatprep.subr.bf16.mxu0 0
        %1233 = vmatpush2.bf16.msra.mxu0 0
        %1234 = vmatprep.subr.bf16.mxu0 0
        %1235 = vmatpush2.bf16.msra.mxu0 0
        %1236 = vmatprep.subr.bf16.mxu0 0
        %1237 = vmatpush2.bf16.msra.mxu0 0
        %1238 = vmatprep.mubr.bf16.mxu0 0
        %1239 = vmatmul.mubr.bf16.gmra.mxu0 %v1198
        %v1240 = vpop.f32.mrf.mxu0
        %v1241 = vadd.f32 %v1170, %v1240
        %v1242 = vpop.f32.mrf.mxu0
        %v1243 = vadd.f32 %v1170, %v1242
        %v1244 = vpop.f32.mrf.mxu0
        %v1245 = vpop.f32.mrf.mxu0
        %1246 = vdwg.mxu0
        %v1247 = vmax.f32 %v1241, 0.0
        %v1248 = vmax.f32 %v1243, 0.0
        %1249 = vst [vmem:[%s228 + $0x10] sm:$0xff] %v1247
        %1250 = vst [vmem:[%s228 + $0x18] sm:$0xff] %v1248
        %v1251 = vld [vmem:[%s200] sm:$0xff]
        %v1252 = vld [vmem:[%s200 + $0x8] sm:$0xf]
        %s1253 = scalar_lea.vmem [#allocation6], 34
        %v1254 = vld [vmem:[%s1253] ss:$8 sm:$0x3]
        %v1256 = vlaneseq
        %v1257 = vshrl.u32 %v1256, 7
        %v1258 = vsub.s32 0, %v1257
        %v1259 = vrot.slane %v1254, %v1258
        %v1260 = vlaneseq
        %v1261 = vshrl.u32 %v1260, 7
        %v1262 = vsub.s32 1, %v1261
        %v1263 = vrot.slane %v1254, %v1262
        %v1264 = vcombine.low %v1259, %v1263
        %1265 = vrot.lane.b32.xlu0 %v1264, 9
        %v1266 = vpop.permute.xlu0 %1265
        %v1267 = vrot.slane %v1266, 4
        %vm1268 = vcmask 72704
        %v1269 = vsel %vm1268, %v1267, %v1266
        %v1272 = vmul.f32 %v1251, %v1269
        %v1273 = vmul.f32 %v1252, %v1267
        %v1275 = vcombine.high %v1272, %v1272
        %v1277 = vpack.c.bf16 %v1272, %v1272
        %v1278 = vpack.c.bf16 %v1275, %v1275
        %v1279 = vpack.c.bf16 %v1273, %v1273
        %v1283 = vunpack.c.l.b16 %v1277
        %v1284 = vunpack.c.l.b16 %v1278
        %v1285 = vunpack.c.l.b16 %v1279
        %v1286 = vpack.c.b16 %v1284, %v1283
        %v1287 = vpack.c.b16 %v1285, %v1285
        %1288 = vrot.lane.b32.xlu0 %v1286, 119
        %v1289 = vpop.permute.xlu0 %1288
        %1290 = vrot.lane.b32.xlu0 %v1287, 119
        %v1291 = vpop.permute.xlu0 %1290
        %v1292 = vrot.slane %v1289, 4
        %v1293 = vrot.slane %v1291, 4
        %v1294 = vsel %vm272, %v1292, %v1293
        %vm1295 = vcmask 973824
        %v1296 = vsel %vm1295, %v1289, %v1294
        %s1298 = scalar_lea.vmem [#allocation2], 80
        %1299 = vst [vmem:[%s1298] sm:$0x33] %v1296
        %v1300 = vld [vmem:[%s200] sm:$0xff]
        %v1301 = vld [vmem:[%s200 + $0x8] sm:$0xf]
        %s1302 = scalar_lea.vmem [#allocation6], 35
        %v1303 = vld [vmem:[%s1302] ss:$8 sm:$0x3]
        %v1305 = vlaneseq
        %v1306 = vshrl.u32 %v1305, 7
        %v1307 = vsub.s32 0, %v1306
        %v1308 = vrot.slane %v1303, %v1307
        %v1309 = vlaneseq
        %v1310 = vshrl.u32 %v1309, 7
        %v1311 = vsub.s32 1, %v1310
        %v1312 = vrot.slane %v1303, %v1311
        %v1313 = vcombine.low %v1308, %v1312
        %1314 = vrot.lane.b32.xlu0 %v1313, 16
        %v1315 = vpop.permute.xlu0 %1314
        %v1316 = vrot.slane %v1315, 4
        %vm1317 = vcmask 130048
        %v1318 = vsel %vm1317, %v1316, %v1315
        %v1321 = vmul.f32 %v1300, %v1318
        %v1322 = vmul.f32 %v1301, %v1316
        %v1324 = vcombine.high %v1321, %v1321
        %v1326 = vpack.c.bf16 %v1321, %v1321
        %v1327 = vpack.c.bf16 %v1324, %v1324
        %v1328 = vpack.c.bf16 %v1322, %v1322
        %v1332 = vunpack.c.l.b16 %v1326
        %v1333 = vunpack.c.l.b16 %v1327
        %v1334 = vunpack.c.l.b16 %v1328
        %v1335 = vpack.c.b16 %v1333, %v1332
        %v1336 = vpack.c.b16 %v1334, %v1334
        %v1337 = vrot.slane %v1335, 6
        %v1338 = vrot.slane %v1336, 6
        %1339 = vrot.lane.b32.xlu0 %v1337, 112
        %v1340 = vpop.permute.xlu0 %1339
        %1341 = vrot.lane.b32.xlu0 %v1338, 112
        %v1342 = vpop.permute.xlu0 %1341
        %v1343 = vrot.slane %v1340, 4
        %v1344 = vrot.slane %v1342, 4
        %v1345 = vsel %vm272, %v1343, %v1344
        %vm1346 = vcmask 916480
        %v1347 = vsel %vm1346, %v1340, %v1345
        %1349 = vst [vmem:[%s1298] sm:$0xcc] %v1347
        %v1350 = vld [vmem:[%s200] sm:$0xff]
        %v1351 = vld [vmem:[%s200 + $0x8] sm:$0xf]
        %s1352 = scalar_lea.vmem [#allocation6], 36
        %v1353 = vld [vmem:[%s1352] ss:$8 sm:$0x3]
        %v1355 = vlaneseq
        %v1356 = vshrl.u32 %v1355, 7
        %v1357 = vsub.s32 0, %v1356
        %v1358 = vrot.slane %v1353, %v1357
        %v1359 = vlaneseq
        %v1360 = vshrl.u32 %v1359, 7
        %v1361 = vsub.s32 1, %v1360
        %v1362 = vrot.slane %v1353, %v1361
        %v1363 = vcombine.low %v1358, %v1362
        %1364 = vrot.lane.b32.xlu0 %v1363, 23
        %v1365 = vpop.permute.xlu0 %1364
        %v1366 = vrot.slane %v1365, 4
        %vm1367 = vcmask 187392
        %v1368 = vsel %vm1367, %v1366, %v1365
        %v1371 = vmul.f32 %v1350, %v1368
        %v1372 = vmul.f32 %v1351, %v1366
        %v1374 = vcombine.high %v1371, %v1371
        %v1376 = vpack.c.bf16 %v1371, %v1371
        %v1377 = vpack.c.bf16 %v1374, %v1374
        %v1378 = vpack.c.bf16 %v1372, %v1372
        %v1382 = vunpack.c.l.b16 %v1376
        %v1383 = vunpack.c.l.b16 %v1377
        %v1384 = vunpack.c.l.b16 %v1378
        %v1385 = vpack.c.b16 %v1383, %v1382
        %v1386 = vpack.c.b16 %v1384, %v1384
        %1387 = vrot.lane.b32.xlu0 %v1385, 105
        %v1388 = vpop.permute.xlu0 %1387
        %1389 = vrot.lane.b32.xlu0 %v1386, 105
        %v1390 = vpop.permute.xlu0 %1389
        %v1391 = vrot.slane %v1388, 4
        %v1392 = vrot.slane %v1390, 4
        %v1393 = vsel %vm272, %v1391, %v1392
        %vm1394 = vcmask 859136
        %v1395 = vsel %vm1394, %v1388, %v1393
        %1397 = vst [vmem:[%s1298 + $0x8] sm:$0x33] %v1395
        %v1398 = vld [vmem:[%s200] sm:$0xff]
        %v1399 = vld [vmem:[%s200 + $0x8] sm:$0xf]
        %s1400 = scalar_lea.vmem [#allocation6], 37
        %v1401 = vld [vmem:[%s1400] ss:$8 sm:$0x3]
        %v1403 = vlaneseq
        %v1404 = vshrl.u32 %v1403, 7
        %v1405 = vsub.s32 0, %v1404
        %v1406 = vrot.slane %v1401, %v1405
        %v1407 = vlaneseq
        %v1408 = vshrl.u32 %v1407, 7
        %v1409 = vsub.s32 1, %v1408
        %v1410 = vrot.slane %v1401, %v1409
        %v1411 = vcombine.low %v1406, %v1410
        %1412 = vrot.lane.b32.xlu0 %v1411, 121
        %v1413 = vpop.permute.xlu0 %1412
        %v1414 = vrot.slane %v1413, 4
        %vm1415 = vcmask 990208
        %v1416 = vsel %vm1415, %v1414, %v1413
        %v1419 = vmul.f32 %v1398, %v1416
        %v1420 = vmul.f32 %v1399, %v1414
        %v1422 = vcombine.high %v1419, %v1419
        %v1424 = vpack.c.bf16 %v1419, %v1419
        %v1425 = vpack.c.bf16 %v1422, %v1422
        %v1426 = vpack.c.bf16 %v1420, %v1420
        %v1430 = vunpack.c.l.b16 %v1424
        %v1431 = vunpack.c.l.b16 %v1425
        %v1432 = vunpack.c.l.b16 %v1426
        %v1433 = vpack.c.b16 %v1431, %v1430
        %v1434 = vpack.c.b16 %v1432, %v1432
        %v1435 = vrot.slane %v1433, 6
        %v1436 = vrot.slane %v1434, 6
        %1437 = vrot.lane.b32.xlu0 %v1435, 7
        %v1438 = vpop.permute.xlu0 %1437
        %1439 = vrot.lane.b32.xlu0 %v1436, 7
        %v1440 = vpop.permute.xlu0 %1439
        %v1441 = vrot.slane %v1438, 4
        %v1442 = vrot.slane %v1440, 4
        %v1443 = vsel %vm272, %v1441, %v1442
        %vm1444 = vcmask 56320
        %v1445 = vsel %vm1444, %v1438, %v1443
        %1447 = vst [vmem:[%s1298 + $0x8] sm:$0xcc] %v1445
        %v1448 = vld [vmem:[%s200 + $0x4] sm:$0xff]
        %s1449 = scalar_lea.vmem [#allocation6], 38
        %v1450 = vld [vmem:[%s1449] ss:$8 sm:$0x3]
        %v1452 = vlaneseq
        %v1453 = vshrl.u32 %v1452, 7
        %v1454 = vsub.s32 0, %v1453
        %v1455 = vrot.slane %v1450, %v1454
        %v1456 = vlaneseq
        %v1457 = vshrl.u32 %v1456, 7
        %v1458 = vsub.s32 1, %v1457
        %v1459 = vrot.slane %v1450, %v1458
        %v1460 = vcombine.low %v1455, %v1459
        %v1462 = vmul.f32 %v1448, %v1460
        %v1464 = vcombine.high %v1462, %v1462
        %v1466 = vpack.c.bf16 %v1462, %v1462
        %v1467 = vpack.c.bf16 %v1464, %v1464
        %v1470 = vunpack.c.l.b16 %v1466
        %v1471 = vunpack.c.l.b16 %v1467
        %v1472 = vpack.c.b16 %v1471, %v1470
        %1474 = vst [vmem:[%s1298 + $0x10] sm:$0x33] %v1472
        %v1475 = vld [vmem:[%s200 + $0x4] sm:$0xff]
        %v1476 = vld [vmem:[%s200 + $0xc] sm:$0xf]
        %s1477 = scalar_lea.vmem [#allocation6], 39
        %v1478 = vld [vmem:[%s1477] ss:$8 sm:$0x3]
        %v1480 = vlaneseq
        %v1481 = vshrl.u32 %v1480, 7
        %v1482 = vsub.s32 0, %v1481
        %v1483 = vrot.slane %v1478, %v1482
        %v1484 = vlaneseq
        %v1485 = vshrl.u32 %v1484, 7
        %v1486 = vsub.s32 1, %v1485
        %v1487 = vrot.slane %v1478, %v1486
        %v1488 = vcombine.low %v1483, %v1487
        %1489 = vrot.lane.b32.xlu0 %v1488, 7
        %v1490 = vpop.permute.xlu0 %1489
        %v1491 = vrot.slane %v1490, 4
        %vm1492 = vcmask 56320
        %v1493 = vsel %vm1492, %v1491, %v1490
        %v1496 = vmul.f32 %v1475, %v1493
        %v1497 = vmul.f32 %v1476, %v1491
        %v1499 = vcombine.high %v1496, %v1496
        %v1501 = vpack.c.bf16 %v1496, %v1496
        %v1502 = vpack.c.bf16 %v1499, %v1499
        %v1503 = vpack.c.bf16 %v1497, %v1497
        %v1507 = vunpack.c.l.b16 %v1501
        %v1508 = vunpack.c.l.b16 %v1502
        %v1509 = vunpack.c.l.b16 %v1503
        %v1510 = vpack.c.b16 %v1508, %v1507
        %v1511 = vpack.c.b16 %v1509, %v1509
        %v1512 = vrot.slane %v1510, 6
        %v1513 = vrot.slane %v1511, 6
        %1514 = vrot.lane.b32.xlu0 %v1512, 121
        %v1515 = vpop.permute.xlu0 %1514
        %1516 = vrot.lane.b32.xlu0 %v1513, 121
        %v1517 = vpop.permute.xlu0 %1516
        %v1518 = vrot.slane %v1515, 4
        %v1519 = vrot.slane %v1517, 4
        %v1520 = vsel %vm272, %v1518, %v1519
        %vm1521 = vcmask 990208
        %v1522 = vsel %vm1521, %v1515, %v1520
        %1524 = vst [vmem:[%s1298 + $0x10] sm:$0xcc] %v1522
        %v1525 = vld [vmem:[%s200 + $0x4] sm:$0xff]
        %v1526 = vld [vmem:[%s200 + $0xc] sm:$0xf]
        %s1527 = scalar_lea.vmem [#allocation6], 48
        %v1528 = vld [vmem:[%s1527] ss:$8 sm:$0x3]
        %v1530 = vlaneseq
        %v1531 = vshrl.u32 %v1530, 7
        %v1532 = vsub.s32 0, %v1531
        %v1533 = vrot.slane %v1528, %v1532
        %v1534 = vlaneseq
        %v1535 = vshrl.u32 %v1534, 7
        %v1536 = vsub.s32 1, %v1535
        %v1537 = vrot.slane %v1528, %v1536
        %v1538 = vcombine.low %v1533, %v1537
        %1539 = vrot.lane.b32.xlu0 %v1538, 105
        %v1540 = vpop.permute.xlu0 %1539
        %v1541 = vrot.slane %v1540, 4
        %vm1542 = vcmask 859136
        %v1543 = vsel %vm1542, %v1541, %v1540
        %v1546 = vmul.f32 %v1525, %v1543
        %v1547 = vmul.f32 %v1526, %v1541
        %v1549 = vcombine.high %v1546, %v1546
        %v1551 = vpack.c.bf16 %v1546, %v1546
        %v1552 = vpack.c.bf16 %v1549, %v1549
        %v1553 = vpack.c.bf16 %v1547, %v1547
        %v1557 = vunpack.c.l.b16 %v1551
        %v1558 = vunpack.c.l.b16 %v1552
        %v1559 = vunpack.c.l.b16 %v1553
        %v1560 = vpack.c.b16 %v1558, %v1557
        %v1561 = vpack.c.b16 %v1559, %v1559
        %1562 = vrot.lane.b32.xlu0 %v1560, 23
        %v1563 = vpop.permute.xlu0 %1562
        %1564 = vrot.lane.b32.xlu0 %v1561, 23
        %v1565 = vpop.permute.xlu0 %1564
        %v1566 = vrot.slane %v1563, 4
        %v1567 = vrot.slane %v1565, 4
        %v1568 = vsel %vm272, %v1566, %v1567
        %vm1569 = vcmask 187392
        %v1570 = vsel %vm1569, %v1563, %v1568
        %1572 = vst [vmem:[%s1298 + $0x18] sm:$0x33] %v1570
        %v1573 = vld [vmem:[%s200 + $0x4] sm:$0xff]
        %v1574 = vld [vmem:[%s200 + $0xc] sm:$0xf]
        %s1575 = scalar_lea.vmem [#allocation6], 49
        %v1576 = vld [vmem:[%s1575] ss:$8 sm:$0x3]
        %v1578 = vlaneseq
        %v1579 = vshrl.u32 %v1578, 7
        %v1580 = vsub.s32 0, %v1579
        %v1581 = vrot.slane %v1576, %v1580
        %v1582 = vlaneseq
        %v1583 = vshrl.u32 %v1582, 7
        %v1584 = vsub.s32 1, %v1583
        %v1585 = vrot.slane %v1576, %v1584
        %v1586 = vcombine.low %v1581, %v1585
        %1587 = vrot.lane.b32.xlu0 %v1586, 112
        %v1588 = vpop.permute.xlu0 %1587
        %v1589 = vrot.slane %v1588, 4
        %vm1590 = vcmask 916480
        %v1591 = vsel %vm1590, %v1589, %v1588
        %v1594 = vmul.f32 %v1573, %v1591
        %v1595 = vmul.f32 %v1574, %v1589
        %v1597 = vcombine.high %v1594, %v1594
        %v1599 = vpack.c.bf16 %v1594, %v1594
        %v1600 = vpack.c.bf16 %v1597, %v1597
        %v1601 = vpack.c.bf16 %v1595, %v1595
        %v1605 = vunpack.c.l.b16 %v1599
        %v1606 = vunpack.c.l.b16 %v1600
        %v1607 = vunpack.c.l.b16 %v1601
        %v1608 = vpack.c.b16 %v1606, %v1605
        %v1609 = vpack.c.b16 %v1607, %v1607
        %v1610 = vrot.slane %v1608, 6
        %v1611 = vrot.slane %v1609, 6
        %1612 = vrot.lane.b32.xlu0 %v1610, 16
        %v1613 = vpop.permute.xlu0 %1612
        %1614 = vrot.lane.b32.xlu0 %v1611, 16
        %v1615 = vpop.permute.xlu0 %1614
        %v1616 = vrot.slane %v1613, 4
        %v1617 = vrot.slane %v1615, 4
        %v1618 = vsel %vm272, %v1616, %v1617
        %vm1619 = vcmask 130048
        %v1620 = vsel %vm1619, %v1613, %v1618
        %1622 = vst [vmem:[%s1298 + $0x18] sm:$0xcc] %v1620
        %v1623 = vld [vmem:[%s200 + $0x4] sm:$0xff]
        %v1624 = vld [vmem:[%s200 + $0xc] sm:$0xf]
        %s1625 = scalar_lea.vmem [#allocation6], 50
        %v1626 = vld [vmem:[%s1625] ss:$8 sm:$0x3]
        %v1628 = vlaneseq
        %v1629 = vshrl.u32 %v1628, 7
        %v1630 = vsub.s32 0, %v1629
        %v1631 = vrot.slane %v1626, %v1630
        %v1632 = vlaneseq
        %v1633 = vshrl.u32 %v1632, 7
        %v1634 = vsub.s32 1, %v1633
        %v1635 = vrot.slane %v1626, %v1634
        %v1636 = vcombine.low %v1631, %v1635
        %1637 = vrot.lane.b32.xlu0 %v1636, 119
        %v1638 = vpop.permute.xlu0 %1637
        %v1639 = vrot.slane %v1638, 4
        %vm1640 = vcmask 973824
        %v1641 = vsel %vm1640, %v1639, %v1638
        %v1644 = vmul.f32 %v1623, %v1641
        %v1645 = vmul.f32 %v1624, %v1639
        %v1647 = vcombine.high %v1644, %v1644
        %v1649 = vpack.c.bf16 %v1644, %v1644
        %v1650 = vpack.c.bf16 %v1647, %v1647
        %v1651 = vpack.c.bf16 %v1645, %v1645
        %v1655 = vunpack.c.l.b16 %v1649
        %v1656 = vunpack.c.l.b16 %v1650
        %v1657 = vunpack.c.l.b16 %v1651
        %v1658 = vpack.c.b16 %v1656, %v1655
        %v1659 = vpack.c.b16 %v1657, %v1657
        %1660 = vrot.lane.b32.xlu0 %v1658, 9
        %v1661 = vpop.permute.xlu0 %1660
        %1662 = vrot.lane.b32.xlu0 %v1659, 9
        %v1663 = vpop.permute.xlu0 %1662
        %v1664 = vrot.slane %v1661, 4
        %v1665 = vrot.slane %v1663, 4
        %v1666 = vsel %vm272, %v1664, %v1665
        %vm1667 = vcmask 72704
        %v1668 = vsel %vm1667, %v1661, %v1666
        %1670 = vst [vmem:[%s1298 + $0x20] sm:$0x33] %v1668
        %s1671 = scalar_lea.vmem %s1, 8
        %v1672 = vld [vmem:[%s1671] sm:$0xf]
        %v1673 = vld [vmem:[%s1298] sm:$0xff]
        %v1674 = vld [vmem:[%s1298 + $0x8] sm:$0xff]
        %v1675 = vld [vmem:[%s1298 + $0x10] sm:$0xff]
        %v1676 = vld [vmem:[%s1298 + $0x18] sm:$0xff]
        %v1677 = vld [vmem:[%s1298 + $0x20] sm:$0x33]
        %s1678 = scalar_lea.vmem %s2, 16
        %v1679 = vld [vmem:[%s1678] sm:$0xff]
        %1681 = vset.pattern.permute.xlu0 0
        %1682 = vperm.xlu0 %1681, %v1679
        %v1683 = vpop.permute.xlu0 %1682
        %v1690 = vunpack.c.l.b16 %v1673
        %v1691 = vunpack.c.h.b16 %v1673
        %v1692 = vunpack.c.l.b16 %v1674
        %v1693 = vunpack.c.h.b16 %v1674
        %v1694 = vunpack.c.l.b16 %v1675
        %v1695 = vunpack.c.h.b16 %v1675
        %v1696 = vunpack.c.l.b16 %v1676
        %v1697 = vunpack.c.h.b16 %v1676
        %v1698 = vunpack.c.l.b16 %v1677
        %v1699 = vunpack.c.h.b16 %v1677
        %v1700 = vpack.c.b16 %v1692, %v1690
        %v1701 = vpack.c.b16 %v1693, %v1691
        %v1702 = vpack.c.b16 %v1696, %v1694
        %v1703 = vpack.c.b16 %v1697, %v1695
        %v1704 = vpack.c.b16 %v1698, %v1698
        %v1705 = vpack.c.b16 %v1699, %v1699
        %v1711 = vsel %vm686, %v1672, 0
        %v1714 = vsel %vm690, %v1704, 0
        %v1717 = vsel %vm690, %v1705, 0
        %1719 = vmatprep.subr.bf16.mxu0 0
        %1720 = vmatpush1.bf16.msra.mxu0 0
        %1721 = vmatprep.subr.bf16.mxu0 0
        %1722 = vmatpush1.bf16.msra.mxu0 0
        %1723 = vmatprep.subr.bf16.mxu0 0
        %1724 = vmatpush1.bf16.msra.mxu0 0
        %1725 = vmatprep.subr.bf16.mxu0 0
        %1726 = vmatpush1.bf16.msra.mxu0 0
        %1727 = vmatprep.subr.bf16.mxu0 0
        %1728 = vmatpush1.bf16.msra.mxu0 0
        %1729 = vmatprep.subr.bf16.mxu0 %v1717
        %1730 = vmatpush1.bf16.msra.mxu0 %v1714
        %1731 = vmatprep.subr.bf16.mxu0 %v1703
        %1732 = vmatpush1.bf16.msra.mxu0 %v1702
        %1733 = vmatprep.subr.bf16.mxu0 %v1701
        %1734 = vmatpush1.bf16.msra.mxu0 %v1700
        %1735 = vmatprep.subr.bf16.mxu0 0
        %1736 = vmatpush2.bf16.msra.mxu0 0
        %1737 = vmatprep.subr.bf16.mxu0 0
        %1738 = vmatpush2.bf16.msra.mxu0 0
        %1739 = vmatprep.subr.bf16.mxu0 0
        %1740 = vmatpush2.bf16.msra.mxu0 0
        %1741 = vmatprep.subr.bf16.mxu0 0
        %1742 = vmatpush2.bf16.msra.mxu0 0
        %1743 = vmatprep.subr.bf16.mxu0 0
        %1744 = vmatpush2.bf16.msra.mxu0 0
        %1745 = vmatprep.subr.bf16.mxu0 0
        %1746 = vmatpush2.bf16.msra.mxu0 0
        %1747 = vmatprep.subr.bf16.mxu0 0
        %1748 = vmatpush2.bf16.msra.mxu0 0
        %1749 = vmatprep.subr.bf16.mxu0 0
        %1750 = vmatpush2.bf16.msra.mxu0 0
        %1751 = vmatprep.mubr.bf16.mxu0 0
        %1752 = vmatmul.mubr.bf16.gmra.mxu0 %v1711
        %v1753 = vpop.f32.mrf.mxu0
        %v1754 = vadd.f32 %v1683, %v1753
        %v1755 = vpop.f32.mrf.mxu0
        %v1756 = vadd.f32 %v1683, %v1755
        %v1757 = vpop.f32.mrf.mxu0
        %v1758 = vpop.f32.mrf.mxu0
        %1759 = vdwg.mxu0
        %v1760 = vmax.f32 %v1754, 0.0
        %v1761 = vmax.f32 %v1756, 0.0
        %1762 = vst [vmem:[%s228 + $0x20] sm:$0xff] %v1760
        %1763 = vst [vmem:[%s228 + $0x28] sm:$0xff] %v1761
        %s1764 = sand.u32 %s119, 1
        %s1765 = scalar_lea.sflag [#allocation5], %s1764
        %s1766 = sand.u32 %s119, 1
        %s1767 = smul.addr %s1766, 48
        %s1768 = scalar_lea.vmem [#allocation8], %s1767
        // Predicated region
        $region45: #{tpu_custom_call.1} parent=35 // pred_check
          %p1769 = pneg %p129
        $region46: #{tpu_custom_call.1} parent=35 // pred_check_branch
          %1771 = sbr.rel (%p1769) target = $region48
        $region47: #{tpu_custom_call.1} parent=35 // pred_region
          %s1773 = ssub.s32 768, 768
          %1774 = vsyncadd %s1765, %s1773
          %s1775 = smul.addr %s22, 6
          %s1776 = smul.addr %s1775, 128
          %s1777 = scalar_lea.hbm %s4, %s1776
          %s1778 = sshll.u32 %s1768, 4
          %s1779 = int_to_ptr.vmem [resolvable:$true] %s1778
          %1784 = dma.vmem_to_hbm [thread:$0]  %s1779, 768, %s1777, %s1765, 256, 256, 16
        $region48: #{tpu_custom_call.1} parent=35 // pred_fallthru
          _
      $region36: #{tpu_custom_call.1} parent=5 // pred_fallthru
        _
      %p1785 = scmp.le.s32.totalorder 2, %s17
      // Predicated region
      $region49: #{tpu_custom_call.1} parent=5 // pred_check
        %p1786 = pneg %p1785
      $region50: #{tpu_custom_call.1} parent=5 // pred_check_branch
        %1788 = sbr.rel (%p1786) target = $region52
      $region51: #{tpu_custom_call.1} parent=5 // pred_region
        %s1789 = ssub.s32 %s17, 2
        // Predicated region
        $region53: #{tpu_custom_call.1} parent=51 // pred_check
          %p1790 = pneg %p135
        $region54: #{tpu_custom_call.1} parent=51 // pred_check_branch
          %1792 = sbr.rel (%p1790) target = $region56
        $region55: #{tpu_custom_call.1} parent=51 // pred_region
          %s1793 = sand.u32 %s120, 1
          %s1794 = scalar_lea.sflag [#allocation5], %s1793
          %s1795 = sand.u32 %s120, 1
          %s1796 = smul.addr %s1795, 48
          %s1797 = scalar_lea.vmem [#allocation8], %s1796
          %1798 = dma.done %s1794, 768
        $region56: #{tpu_custom_call.1} parent=51 // pred_fallthru
          _
      $region52: #{tpu_custom_call.1} parent=5 // pred_fallthru
        _
    $region6: #{tpu_custom_call.1} parent=1 // loop_footer
      %s21 = sadd.s32 1, %s17
    $region7: #{tpu_custom_call.1} parent=1 // loop_footer_branch
      %16 = sbr.rel target = $region3
    $region8: #{tpu_custom_call.1} parent=1 // loop_exit
      _
    %1799 = vsyncpa [#allocation4], 1
    %s1800 = scalar_lea.sflag [#allocation4], 1
    %1801 = vsyncpa %s1800, 1
    %1802 = vsyncpa [#allocation7], 1
    %1803 = vsyncpa [#allocation5], 1
    %s1804 = scalar_lea.sflag [#allocation5], 1
    %1805 = vsyncpa %s1804, 1

</llo_original>
